<compile_context>
chip_gen: v7x
topology: tpu7x:2x2x1
jax: 0.10.0
libtpu: 0.0.40
codegen_flags: <defaults>
</compile_context>

<pallas_src>
import functools

import jax
import jax.numpy as jnp
from jax import lax
from jax.experimental import pallas as pl
from jax.experimental.pallas import tpu as pltpu

EPS = 1e-5                       # nn.BatchNorm2d default
LANE = 128                       # TPU lane width; Cout padded to a multiple of this
COMPUTE_DTYPE = jnp.bfloat16     # MXU feed dtype (accumulation stays f32)
VMEM_BUDGET = 16 * 1024 * 1024   # per-call block budget (safe on v5e/v6e/v7x)
VMEM_LIMIT = 32 * 1024 * 1024


def _round_up(x, m):
    return (x + m - 1) // m * m


# ---------------------------------------------------------------------------
# Kernel 1: 3x3 conv as one im2col MXU matmul + per-tile BN partial statistics
# ---------------------------------------------------------------------------
def _conv_stats_kernel(x_ref, w_ref, out_ref, stats_ref):
    """x_ref    : (TH+2, W+2, Cin)  spatially padded input row-tile (halo included)
       w_ref    : (9*Cin, Cpad)     im2col-ordered weights, Cout zero-padded to Cpad
       out_ref  : (TH*W, Cpad)      pre-BN conv output tile (lane-dense)
       stats_ref: (2, Cpad)         per-tile [sum, sum_of_squares] over rows
    """
    thp, wp, cin = x_ref.shape
    th, wsp = thp - 2, wp - 2

    x = x_ref[...].astype(COMPUTE_DTYPE)

    # im2col: 9 shifted views concatenated along the contraction axis -> K = 9*Cin.
    pieces = []
    for dy in range(3):
        for dx in range(3):
            pieces.append(x[dy:dy + th, dx:dx + wsp, :].reshape(th * wsp, cin))
    patch = jnp.concatenate(pieces, axis=-1)                  # (TH*W, 9*Cin)

    acc = jnp.dot(patch, w_ref[...].astype(COMPUTE_DTYPE),
                  preferred_element_type=jnp.float32)         # (TH*W, Cpad), f32
    out_ref[...] = acc

    # Partial batch-norm statistics for this tile (reduced across tiles outside).
    s = jnp.sum(acc, axis=0, keepdims=True)                   # (1, Cpad)
    ss = jnp.sum(acc * acc, axis=0, keepdims=True)            # (1, Cpad)
    stats_ref[...] = jnp.concatenate([s, ss], axis=0)         # (2, Cpad)


# ---------------------------------------------------------------------------
# Kernel 2: BN affine apply (precomputed per-channel scale/shift) + ReLU
# ---------------------------------------------------------------------------
def _bn_relu_kernel(y_ref, scale_ref, shift_ref, out_ref):
    out_ref[...] = jnp.maximum(y_ref[...] * scale_ref[...] + shift_ref[...], 0.0)


# ---------------------------------------------------------------------------
# Wrapper glue
# ---------------------------------------------------------------------------
def _pick_tile_rows(H, W, cin, cpad, requested=None):
    """Largest row-tile that divides H and fits the VMEM budget (double-buffered)."""
    if requested is not None and H % requested == 0:
        return requested
    best = 1
    for th in range(1, H + 1):
        if H % th:
            continue
        in_blk = (th + 2) * (W + 2) * cin * 4
        out_blk = th * W * cpad * 4
        w_blk = 9 * cin * cpad * 4
        # in-kernel temporaries: bf16 copy of x, bf16 patch, f32 acc
        scratch = in_blk // 2 + th * W * (9 * cin * 2 + cpad * 4)
        total = 2 * (in_blk + out_blk) + 2 * w_blk + scratch
        if total <= VMEM_BUDGET:
            best = th
    return best


def _gather_halo_row_tiles(x, th):
    """(N, H, W, C) -> (N, H//th, th+2, W+2, C), zero-padded overlapping row tiles."""
    N, H, W, C = x.shape
    nt = H // th
    xp = jnp.pad(x, ((0, 0), (1, 1), (1, 1), (0, 0)))
    rows = jnp.arange(nt)[:, None] * th + jnp.arange(th + 2)[None, :]   # (nt, th+2)
    return xp[:, rows]                                                  # (N, nt, th+2, W+2, C)


def _im2col_weights(w_hwio, cin_arr, cpad):
    """(3,3,Cin_real,Cout_real) -> (9*cin_arr, cpad), zero-padded for extra channels."""
    kh, kw, cin_r, cout_r = w_hwio.shape
    w = jnp.zeros((kh, kw, cin_arr, cpad), jnp.float32)
    w = w.at[:, :, :cin_r, :cout_r].set(w_hwio.astype(jnp.float32))
    return w.reshape(kh * kw * cin_arr, cpad)


def _conv_pass(x_tiles, w_mat, th, W, cpad):
    N, nt, thp, wp, cin = x_tiles.shape
    rows = th * W
    kdim = w_mat.shape[0]
    flops = 2 * N * nt * rows * kdim * cpad
    bytes_accessed = 4 * (x_tiles.size + w_mat.size
                          + N * nt * rows * cpad + N * nt * 2 * cpad)
    return pl.pallas_call(
        _conv_stats_kernel,
        out_shape=(
            jax.ShapeDtypeStruct((N, nt, rows, cpad), jnp.float32),
            jax.ShapeDtypeStruct((N, nt, 2, cpad), jnp.float32),
        ),
        grid=(N, nt),
        in_specs=[
            pl.BlockSpec((None, None, thp, wp, cin), lambda n, t: (n, t, 0, 0, 0)),
            pl.BlockSpec((kdim, cpad), lambda n, t: (0, 0)),
        ],
        out_specs=(
            pl.BlockSpec((None, None, rows, cpad), lambda n, t: (n, t, 0, 0)),
            pl.BlockSpec((None, None, 2, cpad), lambda n, t: (n, t, 0, 0)),
        ),
        compiler_params=pltpu.CompilerParams(
            dimension_semantics=("parallel", "parallel"),
            vmem_limit_bytes=VMEM_LIMIT,
        ),
        cost_estimate=pl.CostEstimate(flops=flops, transcendentals=0,
                                      bytes_accessed=bytes_accessed),
    )(x_tiles, w_mat)


def _bn_relu_pass(y_tiled, scale, shift):
    N, nt, rows, cpad = y_tiled.shape
    return pl.pallas_call(
        _bn_relu_kernel,
        out_shape=jax.ShapeDtypeStruct((N, nt, rows, cpad), jnp.float32),
        grid=(N, nt),
        in_specs=[
            pl.BlockSpec((None, None, rows, cpad), lambda n, t: (n, t, 0, 0)),
            pl.BlockSpec((1, cpad), lambda n, t: (0, 0)),
            pl.BlockSpec((1, cpad), lambda n, t: (0, 0)),
        ],
        out_specs=pl.BlockSpec((None, None, rows, cpad), lambda n, t: (n, t, 0, 0)),
        compiler_params=pltpu.CompilerParams(
            dimension_semantics=("parallel", "parallel"),
            vmem_limit_bytes=VMEM_LIMIT,
        ),
    )(y_tiled, scale, shift)


def _conv_bn_relu_block(x_nhwc, w_hwio, gamma, beta, tile_rows=None):
    """One Conv2d(3x3, pad=1) + BatchNorm2d(batch stats) + ReLU block.

    Input may carry zero-padded channels from the previous block; output is
    returned channel-padded to a multiple of 128 (padded channels are zero).
    """
    N, H, W, cin_arr = x_nhwc.shape
    cout = w_hwio.shape[-1]
    cpad = _round_up(cout, LANE)

    # NOTE: only the row (H) axis is tiled; very wide images would also want W tiling.
    th = _pick_tile_rows(H, W, cin_arr, cpad, requested=tile_rows)

    x_tiles = _gather_halo_row_tiles(x_nhwc, th)        # (N, nt, th+2, W+2, cin)
    w_mat = _im2col_weights(w_hwio, cin_arr, cpad)      # (9*cin, cpad)

    conv_out, stats = _conv_pass(x_tiles, w_mat, th, W, cpad)

    # Phase 2 of BN: reduce per-tile partials -> batch mean/var -> scale/shift.
    count = float(N * H * W)
    s = jnp.sum(stats[:, :, 0, :], axis=(0, 1))                     # (cpad,)
    ss = jnp.sum(stats[:, :, 1, :], axis=(0, 1))
    mean = s / count
    var = jnp.maximum(ss / count - mean * mean, 0.0)                # biased (training-mode) var
    inv_std = lax.rsqrt(var + EPS)
    gamma_p = jnp.zeros((cpad,), jnp.float32).at[:cout].set(gamma.astype(jnp.float32))
    beta_p = jnp.zeros((cpad,), jnp.float32).at[:cout].set(beta.astype(jnp.float32))
    scale = (gamma_p * inv_std).reshape(1, cpad)
    shift = (beta_p - mean * gamma_p * inv_std).reshape(1, cpad)    # padded channels -> 0

    y = _bn_relu_pass(conv_out, scale, shift)                       # (N, nt, th*W, cpad)
    return y.reshape(N, H, W, cpad)


def init_double_conv_params(key, in_channels, out_channels):
    """Deterministic synthetic parameters matching nn.Conv2d / nn.BatchNorm2d shapes."""
    k1, k2, k3, k4 = jax.random.split(key, 4)
    fan1, fan2 = in_channels * 9, out_channels * 9
    return {
        # conv weights stored as (3, 3, Cin, Cout) == HWIO
        "w1": jax.random.normal(k1, (3, 3, in_channels, out_channels), jnp.float32)
              / jnp.sqrt(fan1),
        # Conv biases are kept for interface parity but are folded out of the
        # kernels: BN's batch-mean subtraction cancels them exactly.
        "b1": jax.random.normal(k2, (out_channels,), jnp.float32) * 0.01,
        "g1": jnp.ones((out_channels,), jnp.float32),
        "bt1": jnp.zeros((out_channels,), jnp.float32),
        "w2": jax.random.normal(k3, (3, 3, out_channels, out_channels), jnp.float32)
              / jnp.sqrt(fan2),
        "b2": jax.random.normal(k4, (out_channels,), jnp.float32) * 0.01,
        "g2": jnp.ones((out_channels,), jnp.float32),
        "bt2": jnp.zeros((out_channels,), jnp.float32),
    }


@functools.partial(jax.jit, static_argnames=("tile_rows",))
def double_conv(x_nchw, params, tile_rows=None):
    """DoubleConv.forward: (Conv3x3 -> BN(batch stats) -> ReLU) x 2. NCHW in/out."""
    cout = params["w2"].shape[-1]
    x = jnp.transpose(x_nchw, (0, 2, 3, 1))                         # NCHW -> NHWC
    y = _conv_bn_relu_block(x, params["w1"], params["g1"], params["bt1"], tile_rows)
    y = _conv_bn_relu_block(y, params["w2"], params["g2"], params["bt2"], tile_rows)
    y = y[..., :cout]                                               # drop channel padding
    return jnp.transpose(y, (0, 3, 1, 2))                           # NHWC -> NCHW


if __name__ == "__main__":
    batch, in_channels, out_channels, spatial = 2, 4, 8, 16

    key = jax.random.PRNGKey(0)
    kx, kp = jax.random.split(key)
    x = jax.random.normal(kx, (batch, in_channels, spatial, spatial), jnp.float32)
    params = init_double_conv_params(kp, in_channels, out_channels)

    # tile_rows=8 -> grid (N=2, row_tiles=2): exercises the tiled two-phase BN path.
    out = double_conv(x, params, tile_rows=8)
    out = jax.block_until_ready(out)

    assert out.shape == (batch, out_channels, spatial, spatial)
    assert out.dtype == jnp.float32
    assert bool(jnp.all(jnp.isfinite(out)))
    print("KERNEL_OK")
</pallas_src>

<mosaic_0001>
module attributes {stable_mosaic.version = 11 : i64} {
  func.func @_conv_stats_kernel(%arg0: i32, %arg1: i32, %arg2: memref<1x1x10x18x4xf32, #tpu.memory_space<vmem>>, %arg3: memref<36x128xf32, #tpu.memory_space<vmem>>, %arg4: memref<1x1x128x128xf32, #tpu.memory_space<vmem>>, %arg5: memref<1x1x2x128xf32, #tpu.memory_space<vmem>>) attributes {dimension_semantics = [#tpu.dimension_semantics<parallel>, #tpu.dimension_semantics<parallel>], iteration_bounds = array<i64: 2, 2>, scalar_prefetch = 0 : i64, scratch_operands = 0 : i64, tpu.core_type = #tpu.core_type<tc>, window_params = [{transform_indices = @transform_0, window_bounds = array<i64: 1, 1, 10, 18, 4>}, {pipeline_mode = #tpu.pipeline_mode<synchronous>, transform_indices = @transform_1, window_bounds = array<i64: 36, 128>}, {transform_indices = @transform_2, window_bounds = array<i64: 1, 1, 128, 128>}, {transform_indices = @transform_3, window_bounds = array<i64: 1, 1, 2, 128>}]} {
    %c0 = arith.constant 0 : index
    %c0_0 = arith.constant 0 : index
    %c0_1 = arith.constant 0 : index
    %c0_2 = arith.constant 0 : index
    %c0_3 = arith.constant 0 : index
    %0 = vector.load %arg2[%c0, %c0_0, %c0_1, %c0_2, %c0_3] : memref<1x1x10x18x4xf32, #tpu.memory_space<vmem>>, vector<1x1x10x18x4xf32>
    %1 = vector.shape_cast %0 : vector<1x1x10x18x4xf32> to vector<10x18x4xf32>
    %2 = arith.truncf %1 : vector<10x18x4xf32> to vector<10x18x4xbf16>
    %3 = vector.extract_strided_slice %2 {offsets = [0, 0, 0], sizes = [8, 16, 4], strides = [1, 1, 1]} : vector<10x18x4xbf16> to vector<8x16x4xbf16>
    %4 = vector.shape_cast %3 : vector<8x16x4xbf16> to vector<128x4xbf16>
    %5 = vector.extract_strided_slice %2 {offsets = [0, 1, 0], sizes = [8, 16, 4], strides = [1, 1, 1]} : vector<10x18x4xbf16> to vector<8x16x4xbf16>
    %6 = vector.shape_cast %5 : vector<8x16x4xbf16> to vector<128x4xbf16>
    %7 = vector.extract_strided_slice %2 {offsets = [0, 2, 0], sizes = [8, 16, 4], strides = [1, 1, 1]} : vector<10x18x4xbf16> to vector<8x16x4xbf16>
    %8 = vector.shape_cast %7 : vector<8x16x4xbf16> to vector<128x4xbf16>
    %9 = vector.extract_strided_slice %2 {offsets = [1, 0, 0], sizes = [8, 16, 4], strides = [1, 1, 1]} : vector<10x18x4xbf16> to vector<8x16x4xbf16>
    %10 = vector.shape_cast %9 : vector<8x16x4xbf16> to vector<128x4xbf16>
    %11 = vector.extract_strided_slice %2 {offsets = [1, 1, 0], sizes = [8, 16, 4], strides = [1, 1, 1]} : vector<10x18x4xbf16> to vector<8x16x4xbf16>
    %12 = vector.shape_cast %11 : vector<8x16x4xbf16> to vector<128x4xbf16>
    %13 = vector.extract_strided_slice %2 {offsets = [1, 2, 0], sizes = [8, 16, 4], strides = [1, 1, 1]} : vector<10x18x4xbf16> to vector<8x16x4xbf16>
    %14 = vector.shape_cast %13 : vector<8x16x4xbf16> to vector<128x4xbf16>
    %15 = vector.extract_strided_slice %2 {offsets = [2, 0, 0], sizes = [8, 16, 4], strides = [1, 1, 1]} : vector<10x18x4xbf16> to vector<8x16x4xbf16>
    %16 = vector.shape_cast %15 : vector<8x16x4xbf16> to vector<128x4xbf16>
    %17 = vector.extract_strided_slice %2 {offsets = [2, 1, 0], sizes = [8, 16, 4], strides = [1, 1, 1]} : vector<10x18x4xbf16> to vector<8x16x4xbf16>
    %18 = vector.shape_cast %17 : vector<8x16x4xbf16> to vector<128x4xbf16>
    %19 = vector.extract_strided_slice %2 {offsets = [2, 2, 0], sizes = [8, 16, 4], strides = [1, 1, 1]} : vector<10x18x4xbf16> to vector<8x16x4xbf16>
    %20 = vector.shape_cast %19 : vector<8x16x4xbf16> to vector<128x4xbf16>
    %21 = tpu.concatenate %4, %6, %8, %10, %12, %14, %16, %18, %20 in 1 : vector<128x4xbf16>, vector<128x4xbf16>, vector<128x4xbf16>, vector<128x4xbf16>, vector<128x4xbf16>, vector<128x4xbf16>, vector<128x4xbf16>, vector<128x4xbf16>, vector<128x4xbf16> -> vector<128x36xbf16>
    %c0_4 = arith.constant 0 : index
    %c0_5 = arith.constant 0 : index
    %22 = vector.load %arg3[%c0_4, %c0_5] : memref<36x128xf32, #tpu.memory_space<vmem>>, vector<36x128xf32>
    %23 = arith.truncf %22 : vector<36x128xf32> to vector<36x128xbf16>
    %cst = arith.constant dense<0.000000e+00> : vector<128x128xf32>
    %24 = tpu.matmul %21, %23, %cst {dimension_numbers = #tpu.dot_dimension_numbers<[1], [0], [0], [1], [0, 0, 1, 1], [], []>} : vector<128x36xbf16>, vector<36x128xbf16>, vector<128x128xf32> -> vector<128x128xf32>
    %c0_6 = arith.constant 0 : index
    %c0_7 = arith.constant 0 : index
    %c0_8 = arith.constant 0 : index
    %c0_9 = arith.constant 0 : index
    %25 = vector.load %arg4[%c0_6, %c0_7, %c0_8, %c0_9] : memref<1x1x128x128xf32, #tpu.memory_space<vmem>>, vector<1x1x128x128xf32>
    %26 = vector.shape_cast %25 : vector<1x1x128x128xf32> to vector<128x128xf32>
    %27 = vector.shape_cast %24 : vector<128x128xf32> to vector<1x1x128x128xf32>
    tpu.vector_store %arg4[%c0_6, %c0_7, %c0_8, %c0_9], %27 {strides = array<i32>} : memref<1x1x128x128xf32, #tpu.memory_space<vmem>>, vector<1x1x128x128xf32>,
    %cst_10 = arith.constant dense<0.000000e+00> : vector<128xf32>
    %28 = vector.multi_reduction <add>, %24, %cst_10 [0] : vector<128x128xf32> to vector<128xf32>
    %29 = vector.shape_cast %28 : vector<128xf32> to vector<1x128xf32>
    %30 = arith.mulf %24, %24 : vector<128x128xf32>
    %cst_11 = arith.constant dense<0.000000e+00> : vector<128xf32>
    %31 = vector.multi_reduction <add>, %30, %cst_11 [0] : vector<128x128xf32> to vector<128xf32>
    %32 = vector.shape_cast %31 : vector<128xf32> to vector<1x128xf32>
    %33 = tpu.concatenate %29, %32 in 0 : vector<1x128xf32>, vector<1x128xf32> -> vector<2x128xf32>
    %c0_12 = arith.constant 0 : index
    %c0_13 = arith.constant 0 : index
    %c0_14 = arith.constant 0 : index
    %c0_15 = arith.constant 0 : index
    %34 = vector.load %arg5[%c0_12, %c0_13, %c0_14, %c0_15] : memref<1x1x2x128xf32, #tpu.memory_space<vmem>>, vector<1x1x2x128xf32>
    %35 = vector.shape_cast %34 : vector<1x1x2x128xf32> to vector<2x128xf32>
    %36 = vector.shape_cast %33 : vector<2x128xf32> to vector<1x1x2x128xf32>
    tpu.vector_store %arg5[%c0_12, %c0_13, %c0_14, %c0_15], %36 {strides = array<i32>} : memref<1x1x2x128xf32, #tpu.memory_space<vmem>>, vector<1x1x2x128xf32>,
    return
  }
  func.func @transform_0(%arg0: i32, %arg1: i32) -> (i32, i32, i32, i32, i32) {
    %c0_i32 = arith.constant 0 : i32
    %c0_i32_0 = arith.constant 0 : i32
    %c0_i32_1 = arith.constant 0 : i32
    %c0_i32_2 = arith.constant 0 : i32
    return %arg0, %arg1, %c0_i32, %c0_i32_0, %c0_i32_1 : i32, i32, i32, i32, i32
  }
  func.func @transform_1(%arg0: i32, %arg1: i32) -> (i32, i32) {
    %c0_i32 = arith.constant 0 : i32
    %c0_i32_0 = arith.constant 0 : i32
    %c0_i32_1 = arith.constant 0 : i32
    return %c0_i32, %c0_i32_0 : i32, i32
  }
  func.func @transform_2(%arg0: i32, %arg1: i32) -> (i32, i32, i32, i32) {
    %c0_i32 = arith.constant 0 : i32
    %c0_i32_0 = arith.constant 0 : i32
    %c0_i32_1 = arith.constant 0 : i32
    return %arg0, %arg1, %c0_i32, %c0_i32_0 : i32, i32, i32, i32
  }
  func.func @transform_3(%arg0: i32, %arg1: i32) -> (i32, i32, i32, i32) {
    %c0_i32 = arith.constant 0 : i32
    %c0_i32_0 = arith.constant 0 : i32
    %c0_i32_1 = arith.constant 0 : i32
    return %arg0, %arg1, %c0_i32, %c0_i32_0 : i32, i32, i32, i32
  }
}

module attributes {stable_mosaic.version = 11 : i64} {
  func.func @_bn_relu_kernel(%arg0: i32, %arg1: i32, %arg2: memref<1x1x128x128xf32, #tpu.memory_space<vmem>>, %arg3: memref<1x128xf32, #tpu.memory_space<vmem>>, %arg4: memref<1x128xf32, #tpu.memory_space<vmem>>, %arg5: memref<1x1x128x128xf32, #tpu.memory_space<vmem>>) attributes {dimension_semantics = [#tpu.dimension_semantics<parallel>, #tpu.dimension_semantics<parallel>], iteration_bounds = array<i64: 2, 2>, scalar_prefetch = 0 : i64, scratch_operands = 0 : i64, tpu.core_type = #tpu.core_type<tc>, window_params = [{transform_indices = @transform_0, window_bounds = array<i64: 1, 1, 128, 128>}, {pipeline_mode = #tpu.pipeline_mode<synchronous>, transform_indices = @transform_1, window_bounds = array<i64: 1, 128>}, {pipeline_mode = #tpu.pipeline_mode<synchronous>, transform_indices = @transform_2, window_bounds = array<i64: 1, 128>}, {transform_indices = @transform_3, window_bounds = array<i64: 1, 1, 128, 128>}]} {
    %c0 = arith.constant 0 : index
    %c0_0 = arith.constant 0 : index
    %c0_1 = arith.constant 0 : index
    %c0_2 = arith.constant 0 : index
    %0 = vector.load %arg2[%c0, %c0_0, %c0_1, %c0_2] : memref<1x1x128x128xf32, #tpu.memory_space<vmem>>, vector<1x1x128x128xf32>
    %1 = vector.shape_cast %0 : vector<1x1x128x128xf32> to vector<128x128xf32>
    %c0_3 = arith.constant 0 : index
    %c0_4 = arith.constant 0 : index
    %2 = vector.load %arg3[%c0_3, %c0_4] : memref<1x128xf32, #tpu.memory_space<vmem>>, vector<1x128xf32>
    %3 = vector.broadcast %2 : vector<1x128xf32> to vector<128x128xf32>
    %4 = arith.mulf %1, %3 : vector<128x128xf32>
    %c0_5 = arith.constant 0 : index
    %c0_6 = arith.constant 0 : index
    %5 = vector.load %arg4[%c0_5, %c0_6] : memref<1x128xf32, #tpu.memory_space<vmem>>, vector<1x128xf32>
    %6 = vector.broadcast %5 : vector<1x128xf32> to vector<128x128xf32>
    %7 = arith.addf %4, %6 : vector<128x128xf32>
    %cst = arith.constant 0.000000e+00 : f32
    %8 = vector.broadcast %cst : f32 to vector<128x128xf32>
    %9 = arith.maximumf %7, %8 : vector<128x128xf32>
    %c0_7 = arith.constant 0 : index
    %c0_8 = arith.constant 0 : index
    %c0_9 = arith.constant 0 : index
    %c0_10 = arith.constant 0 : index
    %10 = vector.load %arg5[%c0_7, %c0_8, %c0_9, %c0_10] : memref<1x1x128x128xf32, #tpu.memory_space<vmem>>, vector<1x1x128x128xf32>
    %11 = vector.shape_cast %10 : vector<1x1x128x128xf32> to vector<128x128xf32>
    %12 = vector.shape_cast %9 : vector<128x128xf32> to vector<1x1x128x128xf32>
    tpu.vector_store %arg5[%c0_7, %c0_8, %c0_9, %c0_10], %12 {strides = array<i32>} : memref<1x1x128x128xf32, #tpu.memory_space<vmem>>, vector<1x1x128x128xf32>,
    return
  }
  func.func @transform_0(%arg0: i32, %arg1: i32) -> (i32, i32, i32, i32) {
    %c0_i32 = arith.constant 0 : i32
    %c0_i32_0 = arith.constant 0 : i32
    %c0_i32_1 = arith.constant 0 : i32
    return %arg0, %arg1, %c0_i32, %c0_i32_0 : i32, i32, i32, i32
  }
  func.func @transform_1(%arg0: i32, %arg1: i32) -> (i32, i32) {
    %c0_i32 = arith.constant 0 : i32
    %c0_i32_0 = arith.constant 0 : i32
    %c0_i32_1 = arith.constant 0 : i32
    return %c0_i32, %c0_i32_0 : i32, i32
  }
  func.func @transform_2(%arg0: i32, %arg1: i32) -> (i32, i32) {
    %c0_i32 = arith.constant 0 : i32
    %c0_i32_0 = arith.constant 0 : i32
    %c0_i32_1 = arith.constant 0 : i32
    return %c0_i32, %c0_i32_0 : i32, i32
  }
  func.func @transform_3(%arg0: i32, %arg1: i32) -> (i32, i32, i32, i32) {
    %c0_i32 = arith.constant 0 : i32
    %c0_i32_0 = arith.constant 0 : i32
    %c0_i32_1 = arith.constant 0 : i32
    return %arg0, %arg1, %c0_i32, %c0_i32_0 : i32, i32, i32, i32
  }
}

module attributes {stable_mosaic.version = 11 : i64} {
  func.func @_conv_stats_kernel(%arg0: i32, %arg1: i32, %arg2: memref<1x1x10x18x128xf32, #tpu.memory_space<vmem>>, %arg3: memref<1152x128xf32, #tpu.memory_space<vmem>>, %arg4: memref<1x1x128x128xf32, #tpu.memory_space<vmem>>, %arg5: memref<1x1x2x128xf32, #tpu.memory_space<vmem>>) attributes {dimension_semantics = [#tpu.dimension_semantics<parallel>, #tpu.dimension_semantics<parallel>], iteration_bounds = array<i64: 2, 2>, scalar_prefetch = 0 : i64, scratch_operands = 0 : i64, tpu.core_type = #tpu.core_type<tc>, window_params = [{transform_indices = @transform_0, window_bounds = array<i64: 1, 1, 10, 18, 128>}, {pipeline_mode = #tpu.pipeline_mode<synchronous>, transform_indices = @transform_1, window_bounds = array<i64: 1152, 128>}, {transform_indices = @transform_2, window_bounds = array<i64: 1, 1, 128, 128>}, {transform_indices = @transform_3, window_bounds = array<i64: 1, 1, 2, 128>}]} {
    %c0 = arith.constant 0 : index
    %c0_0 = arith.constant 0 : index
    %c0_1 = arith.constant 0 : index
    %c0_2 = arith.constant 0 : index
    %c0_3 = arith.constant 0 : index
    %0 = vector.load %arg2[%c0, %c0_0, %c0_1, %c0_2, %c0_3] : memref<1x1x10x18x128xf32, #tpu.memory_space<vmem>>, vector<1x1x10x18x128xf32>
    %1 = vector.shape_cast %0 : vector<1x1x10x18x128xf32> to vector<10x18x128xf32>
    %2 = arith.truncf %1 : vector<10x18x128xf32> to vector<10x18x128xbf16>
    %3 = vector.extract_strided_slice %2 {offsets = [0, 0, 0], sizes = [8, 16, 128], strides = [1, 1, 1]} : vector<10x18x128xbf16> to vector<8x16x128xbf16>
    %4 = vector.shape_cast %3 : vector<8x16x128xbf16> to vector<128x128xbf16>
    %5 = vector.extract_strided_slice %2 {offsets = [0, 1, 0], sizes = [8, 16, 128], strides = [1, 1, 1]} : vector<10x18x128xbf16> to vector<8x16x128xbf16>
    %6 = vector.shape_cast %5 : vector<8x16x128xbf16> to vector<128x128xbf16>
    %7 = vector.extract_strided_slice %2 {offsets = [0, 2, 0], sizes = [8, 16, 128], strides = [1, 1, 1]} : vector<10x18x128xbf16> to vector<8x16x128xbf16>
    %8 = vector.shape_cast %7 : vector<8x16x128xbf16> to vector<128x128xbf16>
    %9 = vector.extract_strided_slice %2 {offsets = [1, 0, 0], sizes = [8, 16, 128], strides = [1, 1, 1]} : vector<10x18x128xbf16> to vector<8x16x128xbf16>
    %10 = vector.shape_cast %9 : vector<8x16x128xbf16> to vector<128x128xbf16>
    %11 = vector.extract_strided_slice %2 {offsets = [1, 1, 0], sizes = [8, 16, 128], strides = [1, 1, 1]} : vector<10x18x128xbf16> to vector<8x16x128xbf16>
    %12 = vector.shape_cast %11 : vector<8x16x128xbf16> to vector<128x128xbf16>
    %13 = vector.extract_strided_slice %2 {offsets = [1, 2, 0], sizes = [8, 16, 128], strides = [1, 1, 1]} : vector<10x18x128xbf16> to vector<8x16x128xbf16>
    %14 = vector.shape_cast %13 : vector<8x16x128xbf16> to vector<128x128xbf16>
    %15 = vector.extract_strided_slice %2 {offsets = [2, 0, 0], sizes = [8, 16, 128], strides = [1, 1, 1]} : vector<10x18x128xbf16> to vector<8x16x128xbf16>
    %16 = vector.shape_cast %15 : vector<8x16x128xbf16> to vector<128x128xbf16>
    %17 = vector.extract_strided_slice %2 {offsets = [2, 1, 0], sizes = [8, 16, 128], strides = [1, 1, 1]} : vector<10x18x128xbf16> to vector<8x16x128xbf16>
    %18 = vector.shape_cast %17 : vector<8x16x128xbf16> to vector<128x128xbf16>
    %19 = vector.extract_strided_slice %2 {offsets = [2, 2, 0], sizes = [8, 16, 128], strides = [1, 1, 1]} : vector<10x18x128xbf16> to vector<8x16x128xbf16>
    %20 = vector.shape_cast %19 : vector<8x16x128xbf16> to vector<128x128xbf16>
    %21 = tpu.concatenate %4, %6, %8, %10, %12, %14, %16, %18, %20 in 1 : vector<128x128xbf16>, vector<128x128xbf16>, vector<128x128xbf16>, vector<128x128xbf16>, vector<128x128xbf16>, vector<128x128xbf16>, vector<128x128xbf16>, vector<128x128xbf16>, vector<128x128xbf16> -> vector<128x1152xbf16>
    %c0_4 = arith.constant 0 : index
    %c0_5 = arith.constant 0 : index
    %22 = vector.load %arg3[%c0_4, %c0_5] : memref<1152x128xf32, #tpu.memory_space<vmem>>, vector<1152x128xf32>
    %23 = arith.truncf %22 : vector<1152x128xf32> to vector<1152x128xbf16>
    %cst = arith.constant dense<0.000000e+00> : vector<128x128xf32>
    %24 = tpu.matmul %21, %23, %cst {dimension_numbers = #tpu.dot_dimension_numbers<[1], [0], [0], [1], [0, 0, 1, 1], [], []>} : vector<128x1152xbf16>, vector<1152x128xbf16>, vector<128x128xf32> -> vector<128x128xf32>
    %c0_6 = arith.constant 0 : index
    %c0_7 = arith.constant 0 : index
    %c0_8 = arith.constant 0 : index
    %c0_9 = arith.constant 0 : index
    %25 = vector.load %arg4[%c0_6, %c0_7, %c0_8, %c0_9] : memref<1x1x128x128xf32, #tpu.memory_space<vmem>>, vector<1x1x128x128xf32>
    %26 = vector.shape_cast %25 : vector<1x1x128x128xf32> to vector<128x128xf32>
    %27 = vector.shape_cast %24 : vector<128x128xf32> to vector<1x1x128x128xf32>
    tpu.vector_store %arg4[%c0_6, %c0_7, %c0_8, %c0_9], %27 {strides = array<i32>} : memref<1x1x128x128xf32, #tpu.memory_space<vmem>>, vector<1x1x128x128xf32>,
    %cst_10 = arith.constant dense<0.000000e+00> : vector<128xf32>
    %28 = vector.multi_reduction <add>, %24, %cst_10 [0] : vector<128x128xf32> to vector<128xf32>
    %29 = vector.shape_cast %28 : vector<128xf32> to vector<1x128xf32>
    %30 = arith.mulf %24, %24 : vector<128x128xf32>
    %cst_11 = arith.constant dense<0.000000e+00> : vector<128xf32>
    %31 = vector.multi_reduction <add>, %30, %cst_11 [0] : vector<128x128xf32> to vector<128xf32>
    %32 = vector.shape_cast %31 : vector<128xf32> to vector<1x128xf32>
    %33 = tpu.concatenate %29, %32 in 0 : vector<1x128xf32>, vector<1x128xf32> -> vector<2x128xf32>
    %c0_12 = arith.constant 0 : index
    %c0_13 = arith.constant 0 : index
    %c0_14 = arith.constant 0 : index
    %c0_15 = arith.constant 0 : index
    %34 = vector.load %arg5[%c0_12, %c0_13, %c0_14, %c0_15] : memref<1x1x2x128xf32, #tpu.memory_space<vmem>>, vector<1x1x2x128xf32>
    %35 = vector.shape_cast %34 : vector<1x1x2x128xf32> to vector<2x128xf32>
    %36 = vector.shape_cast %33 : vector<2x128xf32> to vector<1x1x2x128xf32>
    tpu.vector_store %arg5[%c0_12, %c0_13, %c0_14, %c0_15], %36 {strides = array<i32>} : memref<1x1x2x128xf32, #tpu.memory_space<vmem>>, vector<1x1x2x128xf32>,
    return
  }
  func.func @transform_0(%arg0: i32, %arg1: i32) -> (i32, i32, i32, i32, i32) {
    %c0_i32 = arith.constant 0 : i32
    %c0_i32_0 = arith.constant 0 : i32
    %c0_i32_1 = arith.constant 0 : i32
    %c0_i32_2 = arith.constant 0 : i32
    return %arg0, %arg1, %c0_i32, %c0_i32_0, %c0_i32_1 : i32, i32, i32, i32, i32
  }
  func.func @transform_1(%arg0: i32, %arg1: i32) -> (i32, i32) {
    %c0_i32 = arith.constant 0 : i32
    %c0_i32_0 = arith.constant 0 : i32
    %c0_i32_1 = arith.constant 0 : i32
    return %c0_i32, %c0_i32_0 : i32, i32
  }
  func.func @transform_2(%arg0: i32, %arg1: i32) -> (i32, i32, i32, i32) {
    %c0_i32 = arith.constant 0 : i32
    %c0_i32_0 = arith.constant 0 : i32
    %c0_i32_1 = arith.constant 0 : i32
    return %arg0, %arg1, %c0_i32, %c0_i32_0 : i32, i32, i32, i32
  }
  func.func @transform_3(%arg0: i32, %arg1: i32) -> (i32, i32, i32, i32) {
    %c0_i32 = arith.constant 0 : i32
    %c0_i32_0 = arith.constant 0 : i32
    %c0_i32_1 = arith.constant 0 : i32
    return %arg0, %arg1, %c0_i32, %c0_i32_0 : i32, i32, i32, i32
  }
}

</mosaic_0001>

<llo_original>
// kernel: double_conv.5
$region0: #{double_conv.5}
  #allocation0 [shape = 'u32[]', space=smem, size = 0x4, offset = 0x4, fixed_abs, tag = 'smem constant byte address 0x4 - core index']
  #allocation1 [shape = 'u32[144,128]{1,0:T(1,128)}', space=vmem, size = 0x12000, scoped, tag = 'internal scratch']
  %s0 = inlined_call_operand.vmem [shape: f32[2,2,128,128], index: 0, kind: input, shape index: {}]
  %s1 = inlined_call_operand.vmem [shape: f32[1,128], index: 1, kind: input, shape index: {}]
  %s2 = inlined_call_operand.vmem [shape: f32[1,128], index: 2, kind: input, shape index: {}]
  %s3 = inlined_call_operand.vmem [shape: f32[2,2,128,128], index: 3, kind: output, shape index: {}]
  %s4 = sld [smem:[#allocation0]]
  $region45: #{double_conv.5} parent=0
    _
  %s6 = ssub.s32 1, %s4
  %s7 = scalar_select 0, %s6, %s4
  loop: start=0, step=1, limit=6
  $region2: #{double_conv.5} parent=0 // loop_pre_header
    _
  $region3: #{double_conv.5} parent=0 // loop_header
    %s9 = sphi 0, %s13
    %p10 = scmp.ge.s32.totalorder %s9, 6
    %s16 = sphi 0, %s28
    %s17 = sphi 0, %s24
    %s18 = sphi 0, %s16
    %s19 = sphi 0, %s17
    %s20 = sphi 0, %s18
    %s21 = sphi 0, %s19
    %s33 = sphi 0, %s35
    %s36 = sphi 0, %s33
    %s37 = sphi 0, %s36
    %s53 = sphi 0, %s37
    %s57 = sphi 0, %s57
    %s59 = sphi 0, %s57
    %s60 = sphi 0, %s59
    %s74 = sphi 0, %s60
    %s78 = sphi 0, %s78
    %s80 = sphi 0, %s78
    %s81 = sphi 0, %s80
    %s95 = sphi 0, %s81
    %s103 = sphi 0, %s105
    %s106 = sphi 0, %s103
    %s107 = sphi 0, %s106
    %s123 = sphi 0, %s107
  $region4: #{double_conv.5} parent=0 // loop_header_branch
    %12 = sbr.rel (%p10) target = $region8
  $region5: #{double_conv.5} parent=0 // loop_body
    %s14 = ssub.s32 %s9, 1
    %s15 = ssub.s32 %s9, 2
    %s22 = sadd.s32 1, %s17
    %p23 = scmp.ge.s32.totalorder %s22, 2
    %s24 = scalar_select %p23, 0, %s22
    %s25 = sadd.s32 1, %s16
    %s26 = scalar_select %p23, %s25, %s16
    %p27 = scmp.ge.s32.totalorder %s26, 2
    %s28 = scalar_select %p27, 0, %s26
    %s29 = ssub.s32 %s16, %s28
    %s30 = ssub.s32 %s17, %s24
    %s31 = sor.u32 %s29, %s30
    %p32 = scmp.eq.s32.totalorder %s31, 0
    %s34 = sadd.s32 %s33, 1
    %s35 = scalar_select %p32, %s33, %s34
    %p38 = pneg %p32
    %p39 = scmp.eq.s32.totalorder %s9, 3
    %p40 = por %p38, %p39
    %p41 = scmp.ne.s32.totalorder %s33, %s36
    %p42 = scmp.eq.s32.totalorder %s9, 0
    %p43 = por %p41, %p42
    %p44 = scmp.ne.s32.totalorder %s33, %s36
    %p45 = scmp.eq.s32.totalorder %s14, 3
    %p46 = por %p44, %p45
    %p47 = scmp.ne.s32.totalorder %s36, %s37
    %p48 = scmp.eq.s32.totalorder %s14, 0
    %p49 = por %p47, %p48
    %p50 = scmp.ne.s32.totalorder %s36, %s37
    %p51 = scmp.eq.s32.totalorder %s15, 3
    %p52 = por %p50, %p51
    %p54 = scmp.ne.s32.totalorder %s37, %s53
    %p55 = scmp.eq.s32.totalorder %s15, 0
    %p56 = por %p54, %p55
    %s58 = sadd.s32 %s57, 1
    %p61 = scmp.eq.s32.totalorder %s9, 3
    %p62 = scmp.ne.s32.totalorder %s57, %s59
    %p63 = scmp.eq.s32.totalorder %s9, 0
    %p64 = por %p62, %p63
    %p65 = scmp.ne.s32.totalorder %s57, %s59
    %p66 = scmp.eq.s32.totalorder %s14, 3
    %p67 = por %p65, %p66
    %p68 = scmp.ne.s32.totalorder %s59, %s60
    %p69 = scmp.eq.s32.totalorder %s14, 0
    %p70 = por %p68, %p69
    %p71 = scmp.ne.s32.totalorder %s59, %s60
    %p72 = scmp.eq.s32.totalorder %s15, 3
    %p73 = por %p71, %p72
    %p75 = scmp.ne.s32.totalorder %s60, %s74
    %p76 = scmp.eq.s32.totalorder %s15, 0
    %p77 = por %p75, %p76
    %s79 = sadd.s32 %s78, 1
    %p82 = scmp.eq.s32.totalorder %s9, 3
    %p83 = scmp.ne.s32.totalorder %s78, %s80
    %p84 = scmp.eq.s32.totalorder %s9, 0
    %p85 = por %p83, %p84
    %p86 = scmp.ne.s32.totalorder %s78, %s80
    %p87 = scmp.eq.s32.totalorder %s14, 3
    %p88 = por %p86, %p87
    %p89 = scmp.ne.s32.totalorder %s80, %s81
    %p90 = scmp.eq.s32.totalorder %s14, 0
    %p91 = por %p89, %p90
    %p92 = scmp.ne.s32.totalorder %s80, %s81
    %p93 = scmp.eq.s32.totalorder %s15, 3
    %p94 = por %p92, %p93
    %p96 = scmp.ne.s32.totalorder %s81, %s95
    %p97 = scmp.eq.s32.totalorder %s15, 0
    %p98 = por %p96, %p97
    %s99 = ssub.s32 %s16, %s28
    %s100 = ssub.s32 %s17, %s24
    %s101 = sor.u32 %s99, %s100
    %p102 = scmp.eq.s32.totalorder %s101, 0
    %s104 = sadd.s32 %s103, 1
    %s105 = scalar_select %p102, %s103, %s104
    %p108 = pneg %p102
    %p109 = scmp.eq.s32.totalorder %s9, 3
    %p110 = por %p108, %p109
    %p111 = scmp.ne.s32.totalorder %s103, %s106
    %p112 = scmp.eq.s32.totalorder %s9, 0
    %p113 = por %p111, %p112
    %p114 = scmp.ne.s32.totalorder %s103, %s106
    %p115 = scmp.eq.s32.totalorder %s14, 3
    %p116 = por %p114, %p115
    %p117 = scmp.ne.s32.totalorder %s106, %s107
    %p118 = scmp.eq.s32.totalorder %s14, 0
    %p119 = por %p117, %p118
    %p120 = scmp.ne.s32.totalorder %s106, %s107
    %p121 = scmp.eq.s32.totalorder %s15, 3
    %p122 = por %p120, %p121
    %p124 = scmp.ne.s32.totalorder %s107, %s123
    %p125 = scmp.eq.s32.totalorder %s15, 0
    %p126 = por %p124, %p125
    %p127 = scmp.le.s32.totalorder 1, %s9
    %p128 = scmp.lt.s32.totalorder %s9, 5
    %p129 = pnand %p127, %p128
    %p130 = pneg %p129
    // Predicated region
    $region9: #{double_conv.5} parent=5 // pred_check
      _
    $region10: #{double_conv.5} parent=5 // pred_check_branch
      %132 = sbr.rel (%p129) target = $region12
    $region11: #{double_conv.5} parent=5 // pred_region
      %s133 = ssub.s32 %s9, 1
      // Predicated region
      $region13: #{double_conv.5} parent=11 // pred_check
        %p134 = pneg %p70
      $region14: #{double_conv.5} parent=11 // pred_check_branch
        %136 = sbr.rel (%p134) target = $region16
      $region15: #{double_conv.5} parent=11 // pred_region
        _
      $region16: #{double_conv.5} parent=11 // pred_fallthru
        _
      // Predicated region
      $region17: #{double_conv.5} parent=11 // pred_check
        %p137 = pneg %p91
      $region18: #{double_conv.5} parent=11 // pred_check_branch
        %139 = sbr.rel (%p137) target = $region20
      $region19: #{double_conv.5} parent=11 // pred_region
        _
      $region20: #{double_conv.5} parent=11 // pred_fallthru
        _
    $region12: #{double_conv.5} parent=5 // pred_fallthru
      _
    %p140 = scmp.lt.s32.totalorder %s9, 4
    // Predicated region
    $region21: #{double_conv.5} parent=5 // pred_check
      %p141 = pneg %p140
    $region22: #{double_conv.5} parent=5 // pred_check_branch
      %143 = sbr.rel (%p141) target = $region24
    $region23: #{double_conv.5} parent=5 // pred_region
      // Predicated region
      $region25: #{double_conv.5} parent=23 // pred_check
        %p144 = pneg %p43
      $region26: #{double_conv.5} parent=23 // pred_check_branch
        %146 = sbr.rel (%p144) target = $region28
      $region27: #{double_conv.5} parent=23 // pred_region
        %p147 = scmp.lt.s32.totalorder %s16, 1
        %s148 = scalar_select %p147, %s16, 1
        %p149 = scmp.lt.s32.totalorder %s17, 1
        %s150 = scalar_select %p149, %s17, 1
        %s151 = smul.addr %s150, 16
        %s152 = smul.addr %s148, 32
        %s153 = sadd.s32 %s151, %s152
        %s154 = smul.addr %s153, 8
        %s155 = scalar_lea.vmem %s0, %s154
      $region28: #{double_conv.5} parent=23 // pred_fallthru
        _
    $region24: #{double_conv.5} parent=5 // pred_fallthru
      _
    %p156 = scmp.le.s32.totalorder 1, %s9
    %p157 = scmp.lt.s32.totalorder %s9, 5
    %p158 = pnand %p156, %p157
    %p159 = pneg %p158
    // Predicated region
    $region29: #{double_conv.5} parent=5 // pred_check
      _
    $region30: #{double_conv.5} parent=5 // pred_check_branch
      %161 = sbr.rel (%p158) target = $region32
    $region31: #{double_conv.5} parent=5 // pred_region
      %s162 = ssub.s32 %s9, 1
      %p163 = scmp.lt.s32.totalorder %s18, 1
      %s164 = scalar_select %p163, %s18, 1
      %p165 = scmp.lt.s32.totalorder %s19, 1
      %s166 = scalar_select %p165, %s19, 1
      %s167 = smul.addr %s166, 16
      %s168 = smul.addr %s164, 32
      %s169 = sadd.s32 %s167, %s168
      %s170 = smul.addr %s169, 8
      %s171 = scalar_lea.vmem %s0, %s170
      %p172 = pneg %p49
      %p173 = pneg %p46
      %p174 = pneg %p70
      %p175 = pneg %p67
      %p176 = pneg %p91
      %p177 = pneg %p88
      %p178 = pneg %p119
      %p179 = pneg %p116
      %p180 = scmp.lt.s32.totalorder %s18, 1
      %s181 = scalar_select %p180, %s18, 1
      %p182 = scmp.lt.s32.totalorder %s19, 1
      %s183 = scalar_select %p182, %s19, 1
      %s184 = smul.addr %s183, 16
      %s185 = smul.addr %s181, 32
      %s186 = sadd.s32 %s184, %s185
      %s187 = smul.addr %s186, 8
      %s188 = scalar_lea.vmem %s3, %s187
      %p189 = scmp.lt.s32.totalorder %s18, 1
      %s190 = scalar_select %p189, %s18, 1
      %p191 = scmp.lt.s32.totalorder %s19, 1
      %s192 = scalar_select %p191, %s19, 1
      %s193 = smul.addr %s192, 16
      %s194 = smul.addr %s190, 32
      %s195 = sadd.s32 %s193, %s194
      %s196 = smul.addr %s195, 8
      %s197 = scalar_lea.vmem %s0, %s196
      %p198 = scmp.lt.s32.totalorder %s18, 1
      %s199 = scalar_select %p198, %s18, 1
      %p200 = scmp.lt.s32.totalorder %s19, 1
      %s201 = scalar_select %p200, %s19, 1
      %s202 = smul.addr %s201, 16
      %s203 = smul.addr %s199, 32
      %s204 = sadd.s32 %s202, %s203
      %s205 = smul.addr %s204, 8
      %s206 = scalar_lea.vmem %s3, %s205
      %v207 = vld [vmem:[%s197] sm:$0xff]
      %v208 = vld [vmem:[%s197 + $0x8] sm:$0xff]
      %v209 = vld [vmem:[%s197 + $0x10] sm:$0xff]
      %v210 = vld [vmem:[%s197 + $0x18] sm:$0xff]
      %v211 = vld [vmem:[%s197 + $0x20] sm:$0xff]
      %v212 = vld [vmem:[%s197 + $0x28] sm:$0xff]
      %v213 = vld [vmem:[%s197 + $0x30] sm:$0xff]
      %v214 = vld [vmem:[%s197 + $0x38] sm:$0xff]
      %v215 = vld [vmem:[%s197 + $0x40] sm:$0xff]
      %v216 = vld [vmem:[%s197 + $0x48] sm:$0xff]
      %v217 = vld [vmem:[%s197 + $0x50] sm:$0xff]
      %v218 = vld [vmem:[%s197 + $0x58] sm:$0xff]
      %v219 = vld [vmem:[%s197 + $0x60] sm:$0xff]
      %v220 = vld [vmem:[%s197 + $0x68] sm:$0xff]
      %v221 = vld [vmem:[%s197 + $0x70] sm:$0xff]
      %v222 = vld [vmem:[%s197 + $0x78] sm:$0xff]
      %v223 = vld [vmem:[%s1] sm:$0x1]
      %v225 = vlaneseq
      %v226 = vshrl.u32 %v225, 7
      %v227 = vsub.s32 0, %v226
      %v228 = vrot.slane %v223, %v227
      %v230 = vmul.f32 %v207, %v228
      %v231 = vmul.f32 %v208, %v228
      %v232 = vmul.f32 %v209, %v228
      %v233 = vmul.f32 %v210, %v228
      %v234 = vmul.f32 %v211, %v228
      %v235 = vmul.f32 %v212, %v228
      %v236 = vmul.f32 %v213, %v228
      %v237 = vmul.f32 %v214, %v228
      %v238 = vmul.f32 %v215, %v228
      %v239 = vmul.f32 %v216, %v228
      %v240 = vmul.f32 %v217, %v228
      %v241 = vmul.f32 %v218, %v228
      %v242 = vmul.f32 %v219, %v228
      %v243 = vmul.f32 %v220, %v228
      %v244 = vmul.f32 %v221, %v228
      %v245 = vmul.f32 %v222, %v228
      %v246 = vld [vmem:[%s2] sm:$0x1]
      %v248 = vlaneseq
      %v249 = vshrl.u32 %v248, 7
      %v250 = vsub.s32 0, %v249
      %v251 = vrot.slane %v246, %v250
      %v253 = vadd.f32 %v230, %v251
      %v254 = vadd.f32 %v231, %v251
      %v255 = vadd.f32 %v232, %v251
      %v256 = vadd.f32 %v233, %v251
      %v257 = vadd.f32 %v234, %v251
      %v258 = vadd.f32 %v235, %v251
      %v259 = vadd.f32 %v236, %v251
      %v260 = vadd.f32 %v237, %v251
      %v261 = vadd.f32 %v238, %v251
      %v262 = vadd.f32 %v239, %v251
      %v263 = vadd.f32 %v240, %v251
      %v264 = vadd.f32 %v241, %v251
      %v265 = vadd.f32 %v242, %v251
      %v266 = vadd.f32 %v243, %v251
      %v267 = vadd.f32 %v244, %v251
      %v268 = vadd.f32 %v245, %v251
      %v269 = vmax.f32 %v253, 0.0
      %v270 = vmax.f32 %v254, 0.0
      %v271 = vmax.f32 %v255, 0.0
      %v272 = vmax.f32 %v256, 0.0
      %v273 = vmax.f32 %v257, 0.0
      %v274 = vmax.f32 %v258, 0.0
      %v275 = vmax.f32 %v259, 0.0
      %v276 = vmax.f32 %v260, 0.0
      %v277 = vmax.f32 %v261, 0.0
      %v278 = vmax.f32 %v262, 0.0
      %v279 = vmax.f32 %v263, 0.0
      %v280 = vmax.f32 %v264, 0.0
      %v281 = vmax.f32 %v265, 0.0
      %v282 = vmax.f32 %v266, 0.0
      %v283 = vmax.f32 %v267, 0.0
      %v284 = vmax.f32 %v268, 0.0
      %285 = vst [vmem:[%s206] sm:$0xff] %v269
      %286 = vst [vmem:[%s206 + $0x8] sm:$0xff] %v270
      %287 = vst [vmem:[%s206 + $0x10] sm:$0xff] %v271
      %288 = vst [vmem:[%s206 + $0x18] sm:$0xff] %v272
      %289 = vst [vmem:[%s206 + $0x20] sm:$0xff] %v273
      %290 = vst [vmem:[%s206 + $0x28] sm:$0xff] %v274
      %291 = vst [vmem:[%s206 + $0x30] sm:$0xff] %v275
      %292 = vst [vmem:[%s206 + $0x38] sm:$0xff] %v276
      %293 = vst [vmem:[%s206 + $0x40] sm:$0xff] %v277
      %294 = vst [vmem:[%s206 + $0x48] sm:$0xff] %v278
      %295 = vst [vmem:[%s206 + $0x50] sm:$0xff] %v279
      %296 = vst [vmem:[%s206 + $0x58] sm:$0xff] %v280
      %297 = vst [vmem:[%s206 + $0x60] sm:$0xff] %v281
      %298 = vst [vmem:[%s206 + $0x68] sm:$0xff] %v282
      %299 = vst [vmem:[%s206 + $0x70] sm:$0xff] %v283
      %300 = vst [vmem:[%s206 + $0x78] sm:$0xff] %v284
      %p301 = scmp.lt.s32.totalorder %s18, 1
      %s302 = scalar_select %p301, %s18, 1
      %p303 = scmp.lt.s32.totalorder %s19, 1
      %s304 = scalar_select %p303, %s19, 1
      %s305 = smul.addr %s304, 16
      %s306 = smul.addr %s302, 32
      %s307 = sadd.s32 %s305, %s306
      %s308 = smul.addr %s307, 8
      %s309 = scalar_lea.vmem %s3, %s308
      // Predicated region
      $region33: #{double_conv.5} parent=31 // pred_check
        %p310 = pneg %p116
      $region34: #{double_conv.5} parent=31 // pred_check_branch
        %312 = sbr.rel (%p310) target = $region36
      $region35: #{double_conv.5} parent=31 // pred_region
        _
      $region36: #{double_conv.5} parent=31 // pred_fallthru
        _
    $region32: #{double_conv.5} parent=5 // pred_fallthru
      _
    %p313 = scmp.le.s32.totalorder 2, %s9
    // Predicated region
    $region37: #{double_conv.5} parent=5 // pred_check
      %p314 = pneg %p313
    $region38: #{double_conv.5} parent=5 // pred_check_branch
      %316 = sbr.rel (%p314) target = $region40
    $region39: #{double_conv.5} parent=5 // pred_region
      %s317 = ssub.s32 %s9, 2
      // Predicated region
      $region41: #{double_conv.5} parent=39 // pred_check
        %p318 = pneg %p122
      $region42: #{double_conv.5} parent=39 // pred_check_branch
        %320 = sbr.rel (%p318) target = $region44
      $region43: #{double_conv.5} parent=39 // pred_region
        %p321 = scmp.lt.s32.totalorder %s20, 1
        %s322 = scalar_select %p321, %s20, 1
        %p323 = scmp.lt.s32.totalorder %s21, 1
        %s324 = scalar_select %p323, %s21, 1
        %s325 = smul.addr %s324, 16
        %s326 = smul.addr %s322, 32
        %s327 = sadd.s32 %s325, %s326
        %s328 = smul.addr %s327, 8
        %s329 = scalar_lea.vmem %s3, %s328
      $region44: #{double_conv.5} parent=39 // pred_fallthru
        _
    $region40: #{double_conv.5} parent=5 // pred_fallthru
      _
  $region6: #{double_conv.5} parent=0 // loop_footer
    %s13 = sadd.s32 1, %s9
  $region7: #{double_conv.5} parent=0 // loop_footer_branch
    %8 = sbr.rel target = $region3
  $region8: #{double_conv.5} parent=0 // loop_exit
    _

// kernel: double_conv.4
$region0: #{double_conv.4}
  #allocation0 [shape = 'u32[]', space=smem, size = 0x4, offset = 0x4, fixed_abs, tag = 'smem constant byte address 0x4 - core index']
  #allocation1 [shape = 'u32[144,128]{1,0:T(1,128)}', space=vmem, size = 0x12000, scoped, tag = 'internal scratch']
  %s0 = inlined_call_operand.vmem [shape: f32[2,2,10,18,4], index: 0, kind: input, shape index: {}]
  %s1 = inlined_call_operand.vmem [shape: f32[36,128], index: 1, kind: input, shape index: {}]
  %s2 = inlined_call_operand.vmem [shape: f32[2,2,128,128], index: 2, kind: output, shape index: {0}]
  %s3 = inlined_call_operand.vmem [shape: f32[2,2,2,128], index: 3, kind: output, shape index: {1}]
  %4 = xla_tuple %s2, %s3
  %s5 = sld [smem:[#allocation0]]
  $region49: #{double_conv.4} parent=0
    _
  %s7 = ssub.s32 1, %s5
  %s8 = scalar_select 0, %s7, %s5
  loop: start=0, step=1, limit=6
  $region2: #{double_conv.4} parent=0 // loop_pre_header
    _
  $region3: #{double_conv.4} parent=0 // loop_header
    %s10 = sphi 0, %s14
    %p11 = scmp.ge.s32.totalorder %s10, 6
    %s17 = sphi 0, %s29
    %s18 = sphi 0, %s25
    %s19 = sphi 0, %s17
    %s20 = sphi 0, %s18
    %s21 = sphi 0, %s19
    %s22 = sphi 0, %s20
    %s34 = sphi 0, %s36
    %s37 = sphi 0, %s34
    %s38 = sphi 0, %s37
    %s54 = sphi 0, %s38
    %s58 = sphi 0, %s58
    %s60 = sphi 0, %s58
    %s61 = sphi 0, %s60
    %s75 = sphi 0, %s61
    %s83 = sphi 0, %s85
    %s86 = sphi 0, %s83
    %s87 = sphi 0, %s86
    %s103 = sphi 0, %s87
    %s111 = sphi 0, %s113
    %s114 = sphi 0, %s111
    %s115 = sphi 0, %s114
    %s131 = sphi 0, %s115
  $region4: #{double_conv.4} parent=0 // loop_header_branch
    %13 = sbr.rel (%p11) target = $region8
  $region5: #{double_conv.4} parent=0 // loop_body
    %s15 = ssub.s32 %s10, 1
    %s16 = ssub.s32 %s10, 2
    %s23 = sadd.s32 1, %s18
    %p24 = scmp.ge.s32.totalorder %s23, 2
    %s25 = scalar_select %p24, 0, %s23
    %s26 = sadd.s32 1, %s17
    %s27 = scalar_select %p24, %s26, %s17
    %p28 = scmp.ge.s32.totalorder %s27, 2
    %s29 = scalar_select %p28, 0, %s27
    %s30 = ssub.s32 %s17, %s29
    %s31 = ssub.s32 %s18, %s25
    %s32 = sor.u32 %s30, %s31
    %p33 = scmp.eq.s32.totalorder %s32, 0
    %s35 = sadd.s32 %s34, 1
    %s36 = scalar_select %p33, %s34, %s35
    %p39 = pneg %p33
    %p40 = scmp.eq.s32.totalorder %s10, 3
    %p41 = por %p39, %p40
    %p42 = scmp.ne.s32.totalorder %s34, %s37
    %p43 = scmp.eq.s32.totalorder %s10, 0
    %p44 = por %p42, %p43
    %p45 = scmp.ne.s32.totalorder %s34, %s37
    %p46 = scmp.eq.s32.totalorder %s15, 3
    %p47 = por %p45, %p46
    %p48 = scmp.ne.s32.totalorder %s37, %s38
    %p49 = scmp.eq.s32.totalorder %s15, 0
    %p50 = por %p48, %p49
    %p51 = scmp.ne.s32.totalorder %s37, %s38
    %p52 = scmp.eq.s32.totalorder %s16, 3
    %p53 = por %p51, %p52
    %p55 = scmp.ne.s32.totalorder %s38, %s54
    %p56 = scmp.eq.s32.totalorder %s16, 0
    %p57 = por %p55, %p56
    %s59 = sadd.s32 %s58, 1
    %p62 = scmp.eq.s32.totalorder %s10, 3
    %p63 = scmp.ne.s32.totalorder %s58, %s60
    %p64 = scmp.eq.s32.totalorder %s10, 0
    %p65 = por %p63, %p64
    %p66 = scmp.ne.s32.totalorder %s58, %s60
    %p67 = scmp.eq.s32.totalorder %s15, 3
    %p68 = por %p66, %p67
    %p69 = scmp.ne.s32.totalorder %s60, %s61
    %p70 = scmp.eq.s32.totalorder %s15, 0
    %p71 = por %p69, %p70
    %p72 = scmp.ne.s32.totalorder %s60, %s61
    %p73 = scmp.eq.s32.totalorder %s16, 3
    %p74 = por %p72, %p73
    %p76 = scmp.ne.s32.totalorder %s61, %s75
    %p77 = scmp.eq.s32.totalorder %s16, 0
    %p78 = por %p76, %p77
    %s79 = ssub.s32 %s17, %s29
    %s80 = ssub.s32 %s18, %s25
    %s81 = sor.u32 %s79, %s80
    %p82 = scmp.eq.s32.totalorder %s81, 0
    %s84 = sadd.s32 %s83, 1
    %s85 = scalar_select %p82, %s83, %s84
    %p88 = pneg %p82
    %p89 = scmp.eq.s32.totalorder %s10, 3
    %p90 = por %p88, %p89
    %p91 = scmp.ne.s32.totalorder %s83, %s86
    %p92 = scmp.eq.s32.totalorder %s10, 0
    %p93 = por %p91, %p92
    %p94 = scmp.ne.s32.totalorder %s83, %s86
    %p95 = scmp.eq.s32.totalorder %s15, 3
    %p96 = por %p94, %p95
    %p97 = scmp.ne.s32.totalorder %s86, %s87
    %p98 = scmp.eq.s32.totalorder %s15, 0
    %p99 = por %p97, %p98
    %p100 = scmp.ne.s32.totalorder %s86, %s87
    %p101 = scmp.eq.s32.totalorder %s16, 3
    %p102 = por %p100, %p101
    %p104 = scmp.ne.s32.totalorder %s87, %s103
    %p105 = scmp.eq.s32.totalorder %s16, 0
    %p106 = por %p104, %p105
    %s107 = ssub.s32 %s17, %s29
    %s108 = ssub.s32 %s18, %s25
    %s109 = sor.u32 %s107, %s108
    %p110 = scmp.eq.s32.totalorder %s109, 0
    %s112 = sadd.s32 %s111, 1
    %s113 = scalar_select %p110, %s111, %s112
    %p116 = pneg %p110
    %p117 = scmp.eq.s32.totalorder %s10, 3
    %p118 = por %p116, %p117
    %p119 = scmp.ne.s32.totalorder %s111, %s114
    %p120 = scmp.eq.s32.totalorder %s10, 0
    %p121 = por %p119, %p120
    %p122 = scmp.ne.s32.totalorder %s111, %s114
    %p123 = scmp.eq.s32.totalorder %s15, 3
    %p124 = por %p122, %p123
    %p125 = scmp.ne.s32.totalorder %s114, %s115
    %p126 = scmp.eq.s32.totalorder %s15, 0
    %p127 = por %p125, %p126
    %p128 = scmp.ne.s32.totalorder %s114, %s115
    %p129 = scmp.eq.s32.totalorder %s16, 3
    %p130 = por %p128, %p129
    %p132 = scmp.ne.s32.totalorder %s115, %s131
    %p133 = scmp.eq.s32.totalorder %s16, 0
    %p134 = por %p132, %p133
    %p135 = scmp.le.s32.totalorder 1, %s10
    %p136 = scmp.lt.s32.totalorder %s10, 5
    %p137 = pnand %p135, %p136
    %p138 = pneg %p137
    // Predicated region
    $region9: #{double_conv.4} parent=5 // pred_check
      _
    $region10: #{double_conv.4} parent=5 // pred_check_branch
      %140 = sbr.rel (%p137) target = $region12
    $region11: #{double_conv.4} parent=5 // pred_region
      %s141 = ssub.s32 %s10, 1
      // Predicated region
      $region13: #{double_conv.4} parent=11 // pred_check
        %p142 = pneg %p71
      $region14: #{double_conv.4} parent=11 // pred_check_branch
        %144 = sbr.rel (%p142) target = $region16
      $region15: #{double_conv.4} parent=11 // pred_region
        _
      $region16: #{double_conv.4} parent=11 // pred_fallthru
        _
    $region12: #{double_conv.4} parent=5 // pred_fallthru
      _
    %p145 = scmp.lt.s32.totalorder %s10, 4
    // Predicated region
    $region17: #{double_conv.4} parent=5 // pred_check
      %p146 = pneg %p145
    $region18: #{double_conv.4} parent=5 // pred_check_branch
      %148 = sbr.rel (%p146) target = $region20
    $region19: #{double_conv.4} parent=5 // pred_region
      // Predicated region
      $region21: #{double_conv.4} parent=19 // pred_check
        %p149 = pneg %p44
      $region22: #{double_conv.4} parent=19 // pred_check_branch
        %151 = sbr.rel (%p149) target = $region24
      $region23: #{double_conv.4} parent=19 // pred_region
        %p152 = scmp.lt.s32.totalorder %s17, 1
        %s153 = scalar_select %p152, %s17, 1
        %p154 = scmp.lt.s32.totalorder %s18, 1
        %s155 = scalar_select %p154, %s18, 1
        %s156 = smul.addr %s155, 30
        %s157 = smul.addr %s153, 60
        %s158 = sadd.s32 %s156, %s157
        %s159 = smul.addr %s158, 8
        %s160 = scalar_lea.vmem %s0, %s159
      $region24: #{double_conv.4} parent=19 // pred_fallthru
        _
    $region20: #{double_conv.4} parent=5 // pred_fallthru
      _
    %p161 = scmp.le.s32.totalorder 1, %s10
    %p162 = scmp.lt.s32.totalorder %s10, 5
    %p163 = pnand %p161, %p162
    %p164 = pneg %p163
    // Predicated region
    $region25: #{double_conv.4} parent=5 // pred_check
      _
    $region26: #{double_conv.4} parent=5 // pred_check_branch
      %166 = sbr.rel (%p163) target = $region28
    $region27: #{double_conv.4} parent=5 // pred_region
      %s167 = ssub.s32 %s10, 1
      %p168 = scmp.lt.s32.totalorder %s19, 1
      %s169 = scalar_select %p168, %s19, 1
      %p170 = scmp.lt.s32.totalorder %s20, 1
      %s171 = scalar_select %p170, %s20, 1
      %s172 = smul.addr %s171, 30
      %s173 = smul.addr %s169, 60
      %s174 = sadd.s32 %s172, %s173
      %s175 = smul.addr %s174, 8
      %s176 = scalar_lea.vmem %s0, %s175
      %p177 = pneg %p50
      %p178 = pneg %p47
      %p179 = pneg %p71
      %p180 = pneg %p68
      %p181 = pneg %p99
      %p182 = pneg %p96
      %p183 = scmp.lt.s32.totalorder %s19, 1
      %s184 = scalar_select %p183, %s19, 1
      %p185 = scmp.lt.s32.totalorder %s20, 1
      %s186 = scalar_select %p185, %s20, 1
      %s187 = smul.addr %s186, 16
      %s188 = smul.addr %s184, 32
      %s189 = sadd.s32 %s187, %s188
      %s190 = smul.addr %s189, 8
      %s191 = scalar_lea.vmem %s2, %s190
      %p192 = pneg %p127
      %p193 = pneg %p124
      %p194 = scmp.lt.s32.totalorder %s19, 1
      %s195 = scalar_select %p194, %s19, 1
      %p196 = scmp.lt.s32.totalorder %s20, 1
      %s197 = scalar_select %p196, %s20, 1
      %s198 = smul.addr %s195, 2
      %s199 = sadd.s32 %s197, %s198
      %s200 = smul.addr %s199, 2
      %s201 = scalar_lea.vmem %s3, %s200
      %p202 = scmp.lt.s32.totalorder %s19, 1
      %s203 = scalar_select %p202, %s19, 1
      %p204 = scmp.lt.s32.totalorder %s20, 1
      %s205 = scalar_select %p204, %s20, 1
      %s206 = smul.addr %s205, 30
      %s207 = smul.addr %s203, 60
      %s208 = sadd.s32 %s206, %s207
      %s209 = smul.addr %s208, 8
      %s210 = scalar_lea.vmem %s0, %s209
      %p211 = scmp.lt.s32.totalorder %s19, 1
      %s212 = scalar_select %p211, %s19, 1
      %p213 = scmp.lt.s32.totalorder %s20, 1
      %s214 = scalar_select %p213, %s20, 1
      %s215 = smul.addr %s214, 16
      %s216 = smul.addr %s212, 32
      %s217 = sadd.s32 %s215, %s216
      %s218 = smul.addr %s217, 8
      %s219 = scalar_lea.vmem %s2, %s218
      %p220 = scmp.lt.s32.totalorder %s19, 1
      %s221 = scalar_select %p220, %s19, 1
      %p222 = scmp.lt.s32.totalorder %s20, 1
      %s223 = scalar_select %p222, %s20, 1
      %s224 = smul.addr %s221, 2
      %s225 = sadd.s32 %s223, %s224
      %s226 = smul.addr %s225, 2
      %s227 = scalar_lea.vmem %s3, %s226
      %v229 = vld [vmem:[%s210] sm:$0xff]
      %v230 = vld [vmem:[%s210 + $0x8] sm:$0xff]
      %v231 = vld [vmem:[%s210 + $0x10] sm:$0x3]
      %v232 = vld [vmem:[%s210 + $0x18] sm:$0xff]
      %v233 = vld [vmem:[%s210 + $0x20] sm:$0xff]
      %v234 = vld [vmem:[%s210 + $0x28] sm:$0x3]
      %v235 = vld [vmem:[%s210 + $0x30] sm:$0xff]
      %v236 = vld [vmem:[%s210 + $0x38] sm:$0xff]
      %v237 = vld [vmem:[%s210 + $0x40] sm:$0x3]
      %v238 = vld [vmem:[%s210 + $0x48] sm:$0xff]
      %v239 = vld [vmem:[%s210 + $0x50] sm:$0xff]
      %v240 = vld [vmem:[%s210 + $0x58] sm:$0x3]
      %v241 = vld [vmem:[%s210 + $0x60] sm:$0xff]
      %v242 = vld [vmem:[%s210 + $0x68] sm:$0xff]
      %v243 = vld [vmem:[%s210 + $0x70] sm:$0x3]
      %v244 = vld [vmem:[%s210 + $0x78] sm:$0xff]
      %v245 = vld [vmem:[%s210 + $0x80] sm:$0xff]
      %v246 = vld [vmem:[%s210 + $0x88] sm:$0x3]
      %v247 = vld [vmem:[%s210 + $0x90] sm:$0xff]
      %v248 = vld [vmem:[%s210 + $0x98] sm:$0xff]
      %v249 = vld [vmem:[%s210 + $0xa0] sm:$0x3]
      %v250 = vld [vmem:[%s210 + $0xa8] sm:$0xff]
      %v251 = vld [vmem:[%s210 + $0xb0] sm:$0xff]
      %v252 = vld [vmem:[%s210 + $0xb8] sm:$0x3]
      %v253 = vld [vmem:[%s210 + $0xc0] sm:$0xff]
      %v254 = vld [vmem:[%s210 + $0xc8] sm:$0xff]
      %v255 = vld [vmem:[%s210 + $0xd0] sm:$0x3]
      %v256 = vld [vmem:[%s210 + $0xd8] sm:$0xff]
      %v257 = vld [vmem:[%s210 + $0xe0] sm:$0xff]
      %v258 = vld [vmem:[%s210 + $0xe8] sm:$0x3]
      %v259 = vpack.c.bf16 %v230, %v229
      %v260 = vpack.c.bf16 %v231, %v231
      %v261 = vpack.c.bf16 %v233, %v232
      %v262 = vpack.c.bf16 %v234, %v234
      %v263 = vpack.c.bf16 %v236, %v235
      %v264 = vpack.c.bf16 %v237, %v237
      %v265 = vpack.c.bf16 %v239, %v238
      %v266 = vpack.c.bf16 %v240, %v240
      %v267 = vpack.c.bf16 %v242, %v241
      %v268 = vpack.c.bf16 %v243, %v243
      %v269 = vpack.c.bf16 %v245, %v244
      %v270 = vpack.c.bf16 %v246, %v246
      %v271 = vpack.c.bf16 %v248, %v247
      %v272 = vpack.c.bf16 %v249, %v249
      %v273 = vpack.c.bf16 %v251, %v250
      %v274 = vpack.c.bf16 %v252, %v252
      %v275 = vpack.c.bf16 %v254, %v253
      %v276 = vpack.c.bf16 %v255, %v255
      %v277 = vpack.c.bf16 %v257, %v256
      %v278 = vpack.c.bf16 %v258, %v258
      %vm279 = vsmask.f32 7424
      %v281 = vshrl.u32 %v259, 16
      %v283 = vshll.u32 %v259, 16
      %v285 = vrot.slane %v283, 1
      %v286 = vor.u32 %v281, %v285
      %v288 = vshll.u32 %v260, 16
      %v290 = vrot.slane %v288, 1
      %v291 = vsel %vm279, %v286, %v290
      %v293 = vshrl.u32 %v261, 16
      %v295 = vshll.u32 %v261, 16
      %v297 = vrot.slane %v295, 1
      %v298 = vor.u32 %v293, %v297
      %v300 = vshll.u32 %v262, 16
      %v302 = vrot.slane %v300, 1
      %v303 = vsel %vm279, %v298, %v302
      %v305 = vshrl.u32 %v263, 16
      %v307 = vshll.u32 %v263, 16
      %v309 = vrot.slane %v307, 1
      %v310 = vor.u32 %v305, %v309
      %v312 = vshll.u32 %v264, 16
      %v314 = vrot.slane %v312, 1
      %v315 = vsel %vm279, %v310, %v314
      %v317 = vshrl.u32 %v265, 16
      %v319 = vshll.u32 %v265, 16
      %v321 = vrot.slane %v319, 1
      %v322 = vor.u32 %v317, %v321
      %v324 = vshll.u32 %v266, 16
      %v326 = vrot.slane %v324, 1
      %v327 = vsel %vm279, %v322, %v326
      %v329 = vshrl.u32 %v267, 16
      %v331 = vshll.u32 %v267, 16
      %v333 = vrot.slane %v331, 1
      %v334 = vor.u32 %v329, %v333
      %v336 = vshll.u32 %v268, 16
      %v338 = vrot.slane %v336, 1
      %v339 = vsel %vm279, %v334, %v338
      %v341 = vshrl.u32 %v269, 16
      %v343 = vshll.u32 %v269, 16
      %v345 = vrot.slane %v343, 1
      %v346 = vor.u32 %v341, %v345
      %v348 = vshll.u32 %v270, 16
      %v350 = vrot.slane %v348, 1
      %v351 = vsel %vm279, %v346, %v350
      %v353 = vshrl.u32 %v271, 16
      %v355 = vshll.u32 %v271, 16
      %v357 = vrot.slane %v355, 1
      %v358 = vor.u32 %v353, %v357
      %v360 = vshll.u32 %v272, 16
      %v362 = vrot.slane %v360, 1
      %v363 = vsel %vm279, %v358, %v362
      %v365 = vshrl.u32 %v273, 16
      %v367 = vshll.u32 %v273, 16
      %v369 = vrot.slane %v367, 1
      %v370 = vor.u32 %v365, %v369
      %v372 = vshll.u32 %v274, 16
      %v374 = vrot.slane %v372, 1
      %v375 = vsel %vm279, %v370, %v374
      %vm392 = vcmask 1046528
      %v393 = vrot.slane %v259, 1
      %v394 = vrot.slane %v260, 1
      %v395 = vsel %vm392, %v393, %v394
      %v396 = vrot.slane %v261, 1
      %v397 = vrot.slane %v262, 1
      %v398 = vsel %vm392, %v396, %v397
      %v399 = vrot.slane %v263, 1
      %v400 = vrot.slane %v264, 1
      %v401 = vsel %vm392, %v399, %v400
      %v402 = vrot.slane %v265, 1
      %v403 = vrot.slane %v266, 1
      %v404 = vsel %vm392, %v402, %v403
      %v405 = vrot.slane %v267, 1
      %v406 = vrot.slane %v268, 1
      %v407 = vsel %vm392, %v405, %v406
      %v408 = vrot.slane %v269, 1
      %v409 = vrot.slane %v270, 1
      %v410 = vsel %vm392, %v408, %v409
      %v411 = vrot.slane %v271, 1
      %v412 = vrot.slane %v272, 1
      %v413 = vsel %vm392, %v411, %v412
      %v414 = vrot.slane %v273, 1
      %v415 = vrot.slane %v274, 1
      %v416 = vsel %vm392, %v414, %v415
      %v418 = vshrl.u32 %v275, 16
      %v420 = vshll.u32 %v275, 16
      %v422 = vrot.slane %v420, 1
      %v423 = vor.u32 %v418, %v422
      %v425 = vshll.u32 %v276, 16
      %v427 = vrot.slane %v425, 1
      %v428 = vsel %vm279, %v423, %v427
      %v431 = vrot.slane %v275, 1
      %v432 = vrot.slane %v276, 1
      %v433 = vsel %vm392, %v431, %v432
      %v435 = vshrl.u32 %v277, 16
      %v437 = vshll.u32 %v277, 16
      %v439 = vrot.slane %v437, 1
      %v440 = vor.u32 %v435, %v439
      %v442 = vshll.u32 %v278, 16
      %v444 = vrot.slane %v442, 1
      %v445 = vsel %vm279, %v440, %v444
      %v448 = vrot.slane %v277, 1
      %v449 = vrot.slane %v278, 1
      %v450 = vsel %vm392, %v448, %v449
      %451 = vrot.lane.b32.xlu0 %v291, 4
      %v452 = vpop.permute.xlu0 %451
      %453 = vrot.lane.b32.xlu0 %v303, 4
      %v454 = vpop.permute.xlu0 %453
      %455 = vrot.lane.b32.xlu0 %v315, 4
      %v456 = vpop.permute.xlu0 %455
      %457 = vrot.lane.b32.xlu0 %v327, 4
      %v458 = vpop.permute.xlu0 %457
      %459 = vrot.lane.b32.xlu0 %v339, 4
      %v460 = vpop.permute.xlu0 %459
      %461 = vrot.lane.b32.xlu0 %v351, 4
      %v462 = vpop.permute.xlu0 %461
      %463 = vrot.lane.b32.xlu0 %v363, 4
      %v464 = vpop.permute.xlu0 %463
      %465 = vrot.lane.b32.xlu0 %v375, 4
      %v466 = vpop.permute.xlu0 %465
      %467 = vrot.lane.b32.xlu0 %v395, 8
      %v468 = vpop.permute.xlu0 %467
      %469 = vrot.lane.b32.xlu0 %v398, 8
      %v470 = vpop.permute.xlu0 %469
      %471 = vrot.lane.b32.xlu0 %v401, 8
      %v472 = vpop.permute.xlu0 %471
      %473 = vrot.lane.b32.xlu0 %v404, 8
      %v474 = vpop.permute.xlu0 %473
      %475 = vrot.lane.b32.xlu0 %v407, 8
      %v476 = vpop.permute.xlu0 %475
      %477 = vrot.lane.b32.xlu0 %v410, 8
      %v478 = vpop.permute.xlu0 %477
      %479 = vrot.lane.b32.xlu0 %v413, 8
      %v480 = vpop.permute.xlu0 %479
      %481 = vrot.lane.b32.xlu0 %v416, 8
      %v482 = vpop.permute.xlu0 %481
      %483 = vrot.lane.b32.xlu0 %v261, 12
      %v484 = vpop.permute.xlu0 %483
      %485 = vrot.lane.b32.xlu0 %v263, 12
      %v486 = vpop.permute.xlu0 %485
      %487 = vrot.lane.b32.xlu0 %v265, 12
      %v488 = vpop.permute.xlu0 %487
      %489 = vrot.lane.b32.xlu0 %v267, 12
      %v490 = vpop.permute.xlu0 %489
      %491 = vrot.lane.b32.xlu0 %v269, 12
      %v492 = vpop.permute.xlu0 %491
      %493 = vrot.lane.b32.xlu0 %v271, 12
      %v494 = vpop.permute.xlu0 %493
      %495 = vrot.lane.b32.xlu0 %v273, 12
      %v496 = vpop.permute.xlu0 %495
      %497 = vrot.lane.b32.xlu0 %v275, 12
      %v498 = vpop.permute.xlu0 %497
      %499 = vrot.lane.b32.xlu0 %v303, 16
      %v500 = vpop.permute.xlu0 %499
      %501 = vrot.lane.b32.xlu0 %v315, 16
      %v502 = vpop.permute.xlu0 %501
      %503 = vrot.lane.b32.xlu0 %v327, 16
      %v504 = vpop.permute.xlu0 %503
      %505 = vrot.lane.b32.xlu0 %v339, 16
      %v506 = vpop.permute.xlu0 %505
      %507 = vrot.lane.b32.xlu0 %v351, 16
      %v508 = vpop.permute.xlu0 %507
      %509 = vrot.lane.b32.xlu0 %v363, 16
      %v510 = vpop.permute.xlu0 %509
      %511 = vrot.lane.b32.xlu0 %v375, 16
      %v512 = vpop.permute.xlu0 %511
      %513 = vrot.lane.b32.xlu0 %v428, 16
      %v514 = vpop.permute.xlu0 %513
      %515 = vrot.lane.b32.xlu0 %v398, 20
      %v516 = vpop.permute.xlu0 %515
      %517 = vrot.lane.b32.xlu0 %v401, 20
      %v518 = vpop.permute.xlu0 %517
      %519 = vrot.lane.b32.xlu0 %v404, 20
      %v520 = vpop.permute.xlu0 %519
      %521 = vrot.lane.b32.xlu0 %v407, 20
      %v522 = vpop.permute.xlu0 %521
      %523 = vrot.lane.b32.xlu0 %v410, 20
      %v524 = vpop.permute.xlu0 %523
      %525 = vrot.lane.b32.xlu0 %v413, 20
      %v526 = vpop.permute.xlu0 %525
      %527 = vrot.lane.b32.xlu0 %v416, 20
      %v528 = vpop.permute.xlu0 %527
      %529 = vrot.lane.b32.xlu0 %v433, 20
      %v530 = vpop.permute.xlu0 %529
      %531 = vrot.lane.b32.xlu0 %v263, 24
      %v532 = vpop.permute.xlu0 %531
      %533 = vrot.lane.b32.xlu0 %v265, 24
      %v534 = vpop.permute.xlu0 %533
      %535 = vrot.lane.b32.xlu0 %v267, 24
      %v536 = vpop.permute.xlu0 %535
      %537 = vrot.lane.b32.xlu0 %v269, 24
      %v538 = vpop.permute.xlu0 %537
      %539 = vrot.lane.b32.xlu0 %v271, 24
      %v540 = vpop.permute.xlu0 %539
      %541 = vrot.lane.b32.xlu0 %v273, 24
      %v542 = vpop.permute.xlu0 %541
      %543 = vrot.lane.b32.xlu0 %v275, 24
      %v544 = vpop.permute.xlu0 %543
      %545 = vrot.lane.b32.xlu0 %v277, 24
      %v546 = vpop.permute.xlu0 %545
      %547 = vrot.lane.b32.xlu0 %v315, 28
      %v548 = vpop.permute.xlu0 %547
      %549 = vrot.lane.b32.xlu0 %v327, 28
      %v550 = vpop.permute.xlu0 %549
      %551 = vrot.lane.b32.xlu0 %v339, 28
      %v552 = vpop.permute.xlu0 %551
      %553 = vrot.lane.b32.xlu0 %v351, 28
      %v554 = vpop.permute.xlu0 %553
      %555 = vrot.lane.b32.xlu0 %v363, 28
      %v556 = vpop.permute.xlu0 %555
      %557 = vrot.lane.b32.xlu0 %v375, 28
      %v558 = vpop.permute.xlu0 %557
      %559 = vrot.lane.b32.xlu0 %v428, 28
      %v560 = vpop.permute.xlu0 %559
      %561 = vrot.lane.b32.xlu0 %v445, 28
      %v562 = vpop.permute.xlu0 %561
      %563 = vrot.lane.b32.xlu0 %v401, 32
      %v564 = vpop.permute.xlu0 %563
      %565 = vrot.lane.b32.xlu0 %v404, 32
      %v566 = vpop.permute.xlu0 %565
      %567 = vrot.lane.b32.xlu0 %v407, 32
      %v568 = vpop.permute.xlu0 %567
      %569 = vrot.lane.b32.xlu0 %v410, 32
      %v570 = vpop.permute.xlu0 %569
      %571 = vrot.lane.b32.xlu0 %v413, 32
      %v572 = vpop.permute.xlu0 %571
      %573 = vrot.lane.b32.xlu0 %v416, 32
      %v574 = vpop.permute.xlu0 %573
      %575 = vrot.lane.b32.xlu0 %v433, 32
      %v576 = vpop.permute.xlu0 %575
      %577 = vrot.lane.b32.xlu0 %v450, 32
      %v578 = vpop.permute.xlu0 %577
      %vm579 = vcmask 31744
      %v581 = vsel %vm579, %v259, %v452
      %v583 = vsel %vm579, %v261, %v454
      %v585 = vsel %vm579, %v263, %v456
      %v587 = vsel %vm579, %v265, %v458
      %v589 = vsel %vm579, %v267, %v460
      %v591 = vsel %vm579, %v269, %v462
      %v593 = vsel %vm579, %v271, %v464
      %v595 = vsel %vm579, %v273, %v466
      %vm596 = vcmask 64512
      %v598 = vsel %vm596, %v581, %v468
      %v600 = vsel %vm596, %v583, %v470
      %v602 = vsel %vm596, %v585, %v472
      %v604 = vsel %vm596, %v587, %v474
      %v606 = vsel %vm596, %v589, %v476
      %v608 = vsel %vm596, %v591, %v478
      %v610 = vsel %vm596, %v593, %v480
      %v612 = vsel %vm596, %v595, %v482
      %vm613 = vcmask 97280
      %v615 = vsel %vm613, %v598, %v484
      %v617 = vsel %vm613, %v600, %v486
      %v619 = vsel %vm613, %v602, %v488
      %v621 = vsel %vm613, %v604, %v490
      %v623 = vsel %vm613, %v606, %v492
      %v625 = vsel %vm613, %v608, %v494
      %v627 = vsel %vm613, %v610, %v496
      %v629 = vsel %vm613, %v612, %v498
      %vm630 = vcmask 130048
      %v632 = vsel %vm630, %v615, %v500
      %v634 = vsel %vm630, %v617, %v502
      %v636 = vsel %vm630, %v619, %v504
      %v638 = vsel %vm630, %v621, %v506
      %v640 = vsel %vm630, %v623, %v508
      %v642 = vsel %vm630, %v625, %v510
      %v644 = vsel %vm630, %v627, %v512
      %v646 = vsel %vm630, %v629, %v514
      %vm647 = vcmask 162816
      %v649 = vsel %vm647, %v632, %v516
      %v651 = vsel %vm647, %v634, %v518
      %v653 = vsel %vm647, %v636, %v520
      %v655 = vsel %vm647, %v638, %v522
      %v657 = vsel %vm647, %v640, %v524
      %v659 = vsel %vm647, %v642, %v526
      %v661 = vsel %vm647, %v644, %v528
      %v663 = vsel %vm647, %v646, %v530
      %vm664 = vcmask 195584
      %v666 = vsel %vm664, %v649, %v532
      %v668 = vsel %vm664, %v651, %v534
      %v670 = vsel %vm664, %v653, %v536
      %v672 = vsel %vm664, %v655, %v538
      %v674 = vsel %vm664, %v657, %v540
      %v676 = vsel %vm664, %v659, %v542
      %v678 = vsel %vm664, %v661, %v544
      %v680 = vsel %vm664, %v663, %v546
      %vm681 = vcmask 228352
      %v683 = vsel %vm681, %v666, %v548
      %v685 = vsel %vm681, %v668, %v550
      %v687 = vsel %vm681, %v670, %v552
      %v689 = vsel %vm681, %v672, %v554
      %v691 = vsel %vm681, %v674, %v556
      %v693 = vsel %vm681, %v676, %v558
      %v695 = vsel %vm681, %v678, %v560
      %v697 = vsel %vm681, %v680, %v562
      %vm698 = vcmask 261120
      %v700 = vsel %vm698, %v683, %v564
      %v702 = vsel %vm698, %v685, %v566
      %v704 = vsel %vm698, %v687, %v568
      %v706 = vsel %vm698, %v689, %v570
      %v708 = vsel %vm698, %v691, %v572
      %v710 = vsel %vm698, %v693, %v574
      %v712 = vsel %vm698, %v695, %v576
      %v714 = vsel %vm698, %v697, %v578
      %v715 = vld [vmem:[%s1] sm:$0xff]
      %v716 = vld [vmem:[%s1 + $0x8] sm:$0xff]
      %v717 = vld [vmem:[%s1 + $0x10] sm:$0xff]
      %v718 = vld [vmem:[%s1 + $0x18] sm:$0xff]
      %v719 = vld [vmem:[%s1 + $0x20] sm:$0xf]
      %v720 = vpack.c.bf16 %v716, %v715
      %v721 = vpack.c.bf16 %v718, %v717
      %v722 = vpack.c.bf16 %v719, %v719
      %vm723 = vcmask 293888
      %v724 = vsel %vm723, %v700, 0
      %v726 = vsel %vm723, %v702, 0
      %v728 = vsel %vm723, %v704, 0
      %v730 = vsel %vm723, %v706, 0
      %v732 = vsel %vm723, %v708, 0
      %v734 = vsel %vm723, %v710, 0
      %v736 = vsel %vm723, %v712, 0
      %v738 = vsel %vm723, %v714, 0
      %vm740 = vcmask 1041408
      %v742 = vsel %vm740, %v722, 0
      %744 = vmatprep.subr.bf16.mxu0 0
      %745 = vmatpush1.bf16.msra.mxu0 %v720
      %746 = vmatprep.subr.bf16.mxu0 0
      %747 = vmatpush1.bf16.msra.mxu0 %v721
      %748 = vmatprep.subr.bf16.mxu0 0
      %749 = vmatpush1.bf16.msra.mxu0 %v742
      %750 = vmatprep.subr.bf16.mxu0 0
      %751 = vmatpush1.bf16.msra.mxu0 0
      %752 = vmatprep.subr.bf16.mxu0 0
      %753 = vmatpush1.bf16.msra.mxu0 0
      %754 = vmatprep.subr.bf16.mxu0 0
      %755 = vmatpush1.bf16.msra.mxu0 0
      %756 = vmatprep.subr.bf16.mxu0 0
      %757 = vmatpush1.bf16.msra.mxu0 0
      %758 = vmatprep.subr.bf16.mxu0 0
      %759 = vmatpush1.bf16.msra.mxu0 0
      %760 = vmatprep.subr.bf16.mxu0 0
      %761 = vmatpush1.bf16.msra.mxu0 0
      %762 = vmatprep.subr.bf16.mxu0 0
      %763 = vmatpush1.bf16.msra.mxu0 0
      %764 = vmatprep.subr.bf16.mxu0 0
      %765 = vmatpush1.bf16.msra.mxu0 0
      %766 = vmatprep.subr.bf16.mxu0 0
      %767 = vmatpush1.bf16.msra.mxu0 0
      %768 = vmatprep.subr.bf16.mxu0 0
      %769 = vmatpush1.bf16.msra.mxu0 0
      %770 = vmatprep.subr.bf16.mxu0 0
      %771 = vmatpush1.bf16.msra.mxu0 0
      %772 = vmatprep.subr.bf16.mxu0 0
      %773 = vmatpush1.bf16.msra.mxu0 0
      %774 = vmatprep.subr.bf16.mxu0 0
      %775 = vmatpush1.bf16.msra.mxu0 0
      %776 = vmatprep.mubr.bf16.mxu0 0
      %777 = vmatmul.mubr.bf16.gmra.mrb[0].mxu0 %v724
      %v778 = vpop.f32.mrb[0].mxu0
      %v779 = vadd.f32 0.0, %v778
      %v780 = vpop.f32.mrb[0].mxu0
      %v781 = vpop.f32.mrb[0].mxu0
      %v782 = vadd.f32 0.0, %v781
      %v783 = vpop.f32.mrb[0].mxu0
      %784 = vmatprep.mubr.bf16.mxu0 0
      %785 = vmatmul.mubr.bf16.gmra.mrb[0].mxu0 %v726
      %v786 = vpop.f32.mrb[0].mxu0
      %v787 = vadd.f32 0.0, %v786
      %v788 = vpop.f32.mrb[0].mxu0
      %v789 = vpop.f32.mrb[0].mxu0
      %v790 = vadd.f32 0.0, %v789
      %v791 = vpop.f32.mrb[0].mxu0
      %792 = vmatprep.mubr.bf16.mxu0 0
      %793 = vmatmul.mubr.bf16.gmra.mrb[0].mxu0 %v728
      %v794 = vpop.f32.mrb[0].mxu0
      %v795 = vadd.f32 0.0, %v794
      %v796 = vpop.f32.mrb[0].mxu0
      %v797 = vpop.f32.mrb[0].mxu0
      %v798 = vadd.f32 0.0, %v797
      %v799 = vpop.f32.mrb[0].mxu0
      %800 = vmatprep.mubr.bf16.mxu0 0
      %801 = vmatmul.mubr.bf16.gmra.mrb[0].mxu0 %v730
      %v802 = vpop.f32.mrb[0].mxu0
      %v803 = vadd.f32 0.0, %v802
      %v804 = vpop.f32.mrb[0].mxu0
      %v805 = vpop.f32.mrb[0].mxu0
      %v806 = vadd.f32 0.0, %v805
      %v807 = vpop.f32.mrb[0].mxu0
      %808 = vmatprep.mubr.bf16.mxu0 0
      %809 = vmatmul.mubr.bf16.gmra.mrb[0].mxu0 %v732
      %v810 = vpop.f32.mrb[0].mxu0
      %v811 = vadd.f32 0.0, %v810
      %v812 = vpop.f32.mrb[0].mxu0
      %v813 = vpop.f32.mrb[0].mxu0
      %v814 = vadd.f32 0.0, %v813
      %v815 = vpop.f32.mrb[0].mxu0
      %816 = vmatprep.mubr.bf16.mxu0 0
      %817 = vmatmul.mubr.bf16.gmra.mrb[0].mxu0 %v734
      %v818 = vpop.f32.mrb[0].mxu0
      %v819 = vadd.f32 0.0, %v818
      %v820 = vpop.f32.mrb[0].mxu0
      %v821 = vpop.f32.mrb[0].mxu0
      %v822 = vadd.f32 0.0, %v821
      %v823 = vpop.f32.mrb[0].mxu0
      %824 = vmatprep.mubr.bf16.mxu0 0
      %825 = vmatmul.mubr.bf16.gmra.mrb[0].mxu0 %v736
      %v826 = vpop.f32.mrb[0].mxu0
      %v827 = vadd.f32 0.0, %v826
      %v828 = vpop.f32.mrb[0].mxu0
      %v829 = vpop.f32.mrb[0].mxu0
      %v830 = vadd.f32 0.0, %v829
      %v831 = vpop.f32.mrb[0].mxu0
      %832 = vmatprep.mubr.bf16.mxu0 0
      %833 = vmatmul.mubr.bf16.gmra.mrb[0].mxu0 %v738
      %v834 = vpop.f32.mrb[0].mxu0
      %v835 = vadd.f32 0.0, %v834
      %v836 = vpop.f32.mrb[0].mxu0
      %v837 = vpop.f32.mrb[0].mxu0
      %v838 = vadd.f32 0.0, %v837
      %v839 = vpop.f32.mrb[0].mxu0
      %840 = vdwg.mxu0
      %841 = vst [vmem:[%s219] sm:$0xff] %v779
      %842 = vst [vmem:[%s219 + $0x8] sm:$0xff] %v782
      %843 = vst [vmem:[%s219 + $0x10] sm:$0xff] %v787
      %844 = vst [vmem:[%s219 + $0x18] sm:$0xff] %v790
      %845 = vst [vmem:[%s219 + $0x20] sm:$0xff] %v795
      %846 = vst [vmem:[%s219 + $0x28] sm:$0xff] %v798
      %847 = vst [vmem:[%s219 + $0x30] sm:$0xff] %v803
      %848 = vst [vmem:[%s219 + $0x38] sm:$0xff] %v806
      %849 = vst [vmem:[%s219 + $0x40] sm:$0xff] %v811
      %850 = vst [vmem:[%s219 + $0x48] sm:$0xff] %v814
      %851 = vst [vmem:[%s219 + $0x50] sm:$0xff] %v819
      %852 = vst [vmem:[%s219 + $0x58] sm:$0xff] %v822
      %853 = vst [vmem:[%s219 + $0x60] sm:$0xff] %v827
      %854 = vst [vmem:[%s219 + $0x68] sm:$0xff] %v830
      %855 = vst [vmem:[%s219 + $0x70] sm:$0xff] %v835
      %856 = vst [vmem:[%s219 + $0x78] sm:$0xff] %v838
      %v857 = vadd.f32 %v779, %v782
      %v858 = vadd.f32 %v857, %v787
      %v859 = vadd.f32 %v858, %v790
      %v860 = vadd.f32 %v859, %v795
      %v861 = vadd.f32 %v860, %v798
      %v862 = vadd.f32 %v861, %v803
      %v863 = vadd.f32 %v862, %v806
      %v864 = vadd.f32 %v863, %v811
      %v865 = vadd.f32 %v864, %v814
      %v866 = vadd.f32 %v865, %v819
      %v867 = vadd.f32 %v866, %v822
      %v868 = vadd.f32 %v867, %v827
      %v869 = vadd.f32 %v868, %v830
      %v870 = vadd.f32 %v869, %v835
      %v871 = vadd.f32 %v870, %v838
      %v872 = vrot.slane %v871, 4
      %v873 = vadd.f32 %v871, %v872
      %v874 = vrot.slane %v873, 2
      %v875 = vadd.f32 %v873, %v874
      %v876 = vrot.slane %v875, 1
      %v877 = vadd.f32 %v875, %v876
      %v878 = vmul.f32 %v779, %v779
      %v879 = vmul.f32 %v782, %v782
      %v880 = vmul.f32 %v787, %v787
      %v881 = vmul.f32 %v790, %v790
      %v882 = vmul.f32 %v795, %v795
      %v883 = vmul.f32 %v798, %v798
      %v884 = vmul.f32 %v803, %v803
      %v885 = vmul.f32 %v806, %v806
      %v886 = vmul.f32 %v811, %v811
      %v887 = vmul.f32 %v814, %v814
      %v888 = vmul.f32 %v819, %v819
      %v889 = vmul.f32 %v822, %v822
      %v890 = vmul.f32 %v827, %v827
      %v891 = vmul.f32 %v830, %v830
      %v892 = vmul.f32 %v835, %v835
      %v893 = vmul.f32 %v838, %v838
      %v894 = vadd.f32 %v878, %v879
      %v895 = vadd.f32 %v894, %v880
      %v896 = vadd.f32 %v895, %v881
      %v897 = vadd.f32 %v896, %v882
      %v898 = vadd.f32 %v897, %v883
      %v899 = vadd.f32 %v898, %v884
      %v900 = vadd.f32 %v899, %v885
      %v901 = vadd.f32 %v900, %v886
      %v902 = vadd.f32 %v901, %v887
      %v903 = vadd.f32 %v902, %v888
      %v904 = vadd.f32 %v903, %v889
      %v905 = vadd.f32 %v904, %v890
      %v906 = vadd.f32 %v905, %v891
      %v907 = vadd.f32 %v906, %v892
      %v908 = vadd.f32 %v907, %v893
      %v909 = vrot.slane %v908, 4
      %v910 = vadd.f32 %v908, %v909
      %v911 = vrot.slane %v910, 2
      %v912 = vadd.f32 %v910, %v911
      %v913 = vrot.slane %v912, 1
      %v914 = vadd.f32 %v912, %v913
      %vm915 = vcmask 1040384
      %v916 = vsel %vm915, %v877, %v914
      %917 = vst [vmem:[%s227] sm:$0x3] %v916
      %p918 = scmp.lt.s32.totalorder %s19, 1
      %s919 = scalar_select %p918, %s19, 1
      %p920 = scmp.lt.s32.totalorder %s20, 1
      %s921 = scalar_select %p920, %s20, 1
      %s922 = smul.addr %s921, 16
      %s923 = smul.addr %s919, 32
      %s924 = sadd.s32 %s922, %s923
      %s925 = smul.addr %s924, 8
      %s926 = scalar_lea.vmem %s2, %s925
      %p927 = scmp.lt.s32.totalorder %s19, 1
      %s928 = scalar_select %p927, %s19, 1
      %p929 = scmp.lt.s32.totalorder %s20, 1
      %s930 = scalar_select %p929, %s20, 1
      %s931 = smul.addr %s928, 2
      %s932 = sadd.s32 %s930, %s931
      %s933 = smul.addr %s932, 2
      %s934 = scalar_lea.vmem %s3, %s933
      // Predicated region
      $region29: #{double_conv.4} parent=27 // pred_check
        %p935 = pneg %p96
      $region30: #{double_conv.4} parent=27 // pred_check_branch
        %937 = sbr.rel (%p935) target = $region32
      $region31: #{double_conv.4} parent=27 // pred_region
        _
      $region32: #{double_conv.4} parent=27 // pred_fallthru
        _
      // Predicated region
      $region33: #{double_conv.4} parent=27 // pred_check
        %p938 = pneg %p124
      $region34: #{double_conv.4} parent=27 // pred_check_branch
        %940 = sbr.rel (%p938) target = $region36
      $region35: #{double_conv.4} parent=27 // pred_region
        _
      $region36: #{double_conv.4} parent=27 // pred_fallthru
        _
    $region28: #{double_conv.4} parent=5 // pred_fallthru
      _
    %p941 = scmp.le.s32.totalorder 2, %s10
    // Predicated region
    $region37: #{double_conv.4} parent=5 // pred_check
      %p942 = pneg %p941
    $region38: #{double_conv.4} parent=5 // pred_check_branch
      %944 = sbr.rel (%p942) target = $region40
    $region39: #{double_conv.4} parent=5 // pred_region
      %s945 = ssub.s32 %s10, 2
      // Predicated region
      $region41: #{double_conv.4} parent=39 // pred_check
        %p946 = pneg %p102
      $region42: #{double_conv.4} parent=39 // pred_check_branch
        %948 = sbr.rel (%p946) target = $region44
      $region43: #{double_conv.4} parent=39 // pred_region
        %p949 = scmp.lt.s32.totalorder %s21, 1
        %s950 = scalar_select %p949, %s21, 1
        %p951 = scmp.lt.s32.totalorder %s22, 1
        %s952 = scalar_select %p951, %s22, 1
        %s953 = smul.addr %s952, 16
        %s954 = smul.addr %s950, 32
        %s955 = sadd.s32 %s953, %s954
        %s956 = smul.addr %s955, 8
        %s957 = scalar_lea.vmem %s2, %s956
      $region44: #{double_conv.4} parent=39 // pred_fallthru
        _
      // Predicated region
      $region45: #{double_conv.4} parent=39 // pred_check
        %p958 = pneg %p130
      $region46: #{double_conv.4} parent=39 // pred_check_branch
        %960 = sbr.rel (%p958) target = $region48
      $region47: #{double_conv.4} parent=39 // pred_region
        %p961 = scmp.lt.s32.totalorder %s21, 1
        %s962 = scalar_select %p961, %s21, 1
        %p963 = scmp.lt.s32.totalorder %s22, 1
        %s964 = scalar_select %p963, %s22, 1
        %s965 = smul.addr %s962, 2
        %s966 = sadd.s32 %s964, %s965
        %s967 = smul.addr %s966, 2
        %s968 = scalar_lea.vmem %s3, %s967
      $region48: #{double_conv.4} parent=39 // pred_fallthru
        _
    $region40: #{double_conv.4} parent=5 // pred_fallthru
      _
  $region6: #{double_conv.4} parent=0 // loop_footer
    %s14 = sadd.s32 1, %s10
  $region7: #{double_conv.4} parent=0 // loop_footer_branch
    %9 = sbr.rel target = $region3
  $region8: #{double_conv.4} parent=0 // loop_exit
    _

// kernel: double_conv.6
$region0: #{double_conv.6}
  #allocation0 [shape = 'u32[]', space=smem, size = 0x4, offset = 0x4, fixed_abs, tag = 'smem constant byte address 0x4 - core index']
  #allocation1 [shape = 'u32[144,128]{1,0:T(1,128)}', space=vmem, size = 0x12000, scoped, tag = 'internal scratch']
  %s0 = inlined_call_operand.vmem [shape: f32[2,2,10,18,128], index: 0, kind: input, shape index: {}]
  %s1 = inlined_call_operand.vmem [shape: f32[1152,128], index: 1, kind: input, shape index: {}]
  %s2 = inlined_call_operand.vmem [shape: f32[2,2,128,128], index: 2, kind: output, shape index: {0}]
  %s3 = inlined_call_operand.vmem [shape: f32[2,2,2,128], index: 3, kind: output, shape index: {1}]
  %4 = xla_tuple %s2, %s3
  %s5 = sld [smem:[#allocation0]]
  $region49: #{double_conv.6} parent=0
    _
  %s7 = ssub.s32 1, %s5
  %s8 = scalar_select 0, %s7, %s5
  loop: start=0, step=1, limit=6
  $region2: #{double_conv.6} parent=0 // loop_pre_header
    _
  $region3: #{double_conv.6} parent=0 // loop_header
    %s10 = sphi 0, %s14
    %p11 = scmp.ge.s32.totalorder %s10, 6
    %s17 = sphi 0, %s29
    %s18 = sphi 0, %s25
    %s19 = sphi 0, %s17
    %s20 = sphi 0, %s18
    %s21 = sphi 0, %s19
    %s22 = sphi 0, %s20
    %s34 = sphi 0, %s36
    %s37 = sphi 0, %s34
    %s38 = sphi 0, %s37
    %s54 = sphi 0, %s38
    %s58 = sphi 0, %s58
    %s60 = sphi 0, %s58
    %s61 = sphi 0, %s60
    %s75 = sphi 0, %s61
    %s83 = sphi 0, %s85
    %s86 = sphi 0, %s83
    %s87 = sphi 0, %s86
    %s103 = sphi 0, %s87
    %s111 = sphi 0, %s113
    %s114 = sphi 0, %s111
    %s115 = sphi 0, %s114
    %s131 = sphi 0, %s115
  $region4: #{double_conv.6} parent=0 // loop_header_branch
    %13 = sbr.rel (%p11) target = $region8
  $region5: #{double_conv.6} parent=0 // loop_body
    %s15 = ssub.s32 %s10, 1
    %s16 = ssub.s32 %s10, 2
    %s23 = sadd.s32 1, %s18
    %p24 = scmp.ge.s32.totalorder %s23, 2
    %s25 = scalar_select %p24, 0, %s23
    %s26 = sadd.s32 1, %s17
    %s27 = scalar_select %p24, %s26, %s17
    %p28 = scmp.ge.s32.totalorder %s27, 2
    %s29 = scalar_select %p28, 0, %s27
    %s30 = ssub.s32 %s17, %s29
    %s31 = ssub.s32 %s18, %s25
    %s32 = sor.u32 %s30, %s31
    %p33 = scmp.eq.s32.totalorder %s32, 0
    %s35 = sadd.s32 %s34, 1
    %s36 = scalar_select %p33, %s34, %s35
    %p39 = pneg %p33
    %p40 = scmp.eq.s32.totalorder %s10, 3
    %p41 = por %p39, %p40
    %p42 = scmp.ne.s32.totalorder %s34, %s37
    %p43 = scmp.eq.s32.totalorder %s10, 0
    %p44 = por %p42, %p43
    %p45 = scmp.ne.s32.totalorder %s34, %s37
    %p46 = scmp.eq.s32.totalorder %s15, 3
    %p47 = por %p45, %p46
    %p48 = scmp.ne.s32.totalorder %s37, %s38
    %p49 = scmp.eq.s32.totalorder %s15, 0
    %p50 = por %p48, %p49
    %p51 = scmp.ne.s32.totalorder %s37, %s38
    %p52 = scmp.eq.s32.totalorder %s16, 3
    %p53 = por %p51, %p52
    %p55 = scmp.ne.s32.totalorder %s38, %s54
    %p56 = scmp.eq.s32.totalorder %s16, 0
    %p57 = por %p55, %p56
    %s59 = sadd.s32 %s58, 1
    %p62 = scmp.eq.s32.totalorder %s10, 3
    %p63 = scmp.ne.s32.totalorder %s58, %s60
    %p64 = scmp.eq.s32.totalorder %s10, 0
    %p65 = por %p63, %p64
    %p66 = scmp.ne.s32.totalorder %s58, %s60
    %p67 = scmp.eq.s32.totalorder %s15, 3
    %p68 = por %p66, %p67
    %p69 = scmp.ne.s32.totalorder %s60, %s61
    %p70 = scmp.eq.s32.totalorder %s15, 0
    %p71 = por %p69, %p70
    %p72 = scmp.ne.s32.totalorder %s60, %s61
    %p73 = scmp.eq.s32.totalorder %s16, 3
    %p74 = por %p72, %p73
    %p76 = scmp.ne.s32.totalorder %s61, %s75
    %p77 = scmp.eq.s32.totalorder %s16, 0
    %p78 = por %p76, %p77
    %s79 = ssub.s32 %s17, %s29
    %s80 = ssub.s32 %s18, %s25
    %s81 = sor.u32 %s79, %s80
    %p82 = scmp.eq.s32.totalorder %s81, 0
    %s84 = sadd.s32 %s83, 1
    %s85 = scalar_select %p82, %s83, %s84
    %p88 = pneg %p82
    %p89 = scmp.eq.s32.totalorder %s10, 3
    %p90 = por %p88, %p89
    %p91 = scmp.ne.s32.totalorder %s83, %s86
    %p92 = scmp.eq.s32.totalorder %s10, 0
    %p93 = por %p91, %p92
    %p94 = scmp.ne.s32.totalorder %s83, %s86
    %p95 = scmp.eq.s32.totalorder %s15, 3
    %p96 = por %p94, %p95
    %p97 = scmp.ne.s32.totalorder %s86, %s87
    %p98 = scmp.eq.s32.totalorder %s15, 0
    %p99 = por %p97, %p98
    %p100 = scmp.ne.s32.totalorder %s86, %s87
    %p101 = scmp.eq.s32.totalorder %s16, 3
    %p102 = por %p100, %p101
    %p104 = scmp.ne.s32.totalorder %s87, %s103
    %p105 = scmp.eq.s32.totalorder %s16, 0
    %p106 = por %p104, %p105
    %s107 = ssub.s32 %s17, %s29
    %s108 = ssub.s32 %s18, %s25
    %s109 = sor.u32 %s107, %s108
    %p110 = scmp.eq.s32.totalorder %s109, 0
    %s112 = sadd.s32 %s111, 1
    %s113 = scalar_select %p110, %s111, %s112
    %p116 = pneg %p110
    %p117 = scmp.eq.s32.totalorder %s10, 3
    %p118 = por %p116, %p117
    %p119 = scmp.ne.s32.totalorder %s111, %s114
    %p120 = scmp.eq.s32.totalorder %s10, 0
    %p121 = por %p119, %p120
    %p122 = scmp.ne.s32.totalorder %s111, %s114
    %p123 = scmp.eq.s32.totalorder %s15, 3
    %p124 = por %p122, %p123
    %p125 = scmp.ne.s32.totalorder %s114, %s115
    %p126 = scmp.eq.s32.totalorder %s15, 0
    %p127 = por %p125, %p126
    %p128 = scmp.ne.s32.totalorder %s114, %s115
    %p129 = scmp.eq.s32.totalorder %s16, 3
    %p130 = por %p128, %p129
    %p132 = scmp.ne.s32.totalorder %s115, %s131
    %p133 = scmp.eq.s32.totalorder %s16, 0
    %p134 = por %p132, %p133
    %p135 = scmp.le.s32.totalorder 1, %s10
    %p136 = scmp.lt.s32.totalorder %s10, 5
    %p137 = pnand %p135, %p136
    %p138 = pneg %p137
    // Predicated region
    $region9: #{double_conv.6} parent=5 // pred_check
      _
    $region10: #{double_conv.6} parent=5 // pred_check_branch
      %140 = sbr.rel (%p137) target = $region12
    $region11: #{double_conv.6} parent=5 // pred_region
      %s141 = ssub.s32 %s10, 1
      // Predicated region
      $region13: #{double_conv.6} parent=11 // pred_check
        %p142 = pneg %p71
      $region14: #{double_conv.6} parent=11 // pred_check_branch
        %144 = sbr.rel (%p142) target = $region16
      $region15: #{double_conv.6} parent=11 // pred_region
        _
      $region16: #{double_conv.6} parent=11 // pred_fallthru
        _
    $region12: #{double_conv.6} parent=5 // pred_fallthru
      _
    %p145 = scmp.lt.s32.totalorder %s10, 4
    // Predicated region
    $region17: #{double_conv.6} parent=5 // pred_check
      %p146 = pneg %p145
    $region18: #{double_conv.6} parent=5 // pred_check_branch
      %148 = sbr.rel (%p146) target = $region20
    $region19: #{double_conv.6} parent=5 // pred_region
      // Predicated region
      $region21: #{double_conv.6} parent=19 // pred_check
        %p149 = pneg %p44
      $region22: #{double_conv.6} parent=19 // pred_check_branch
        %151 = sbr.rel (%p149) target = $region24
      $region23: #{double_conv.6} parent=19 // pred_region
        %p152 = scmp.lt.s32.totalorder %s17, 1
        %s153 = scalar_select %p152, %s17, 1
        %p154 = scmp.lt.s32.totalorder %s18, 1
        %s155 = scalar_select %p154, %s18, 1
        %s156 = smul.addr %s155, 30
        %s157 = smul.addr %s153, 60
        %s158 = sadd.s32 %s156, %s157
        %s159 = smul.addr %s158, 8
        %s160 = scalar_lea.vmem %s0, %s159
      $region24: #{double_conv.6} parent=19 // pred_fallthru
        _
    $region20: #{double_conv.6} parent=5 // pred_fallthru
      _
    %p161 = scmp.le.s32.totalorder 1, %s10
    %p162 = scmp.lt.s32.totalorder %s10, 5
    %p163 = pnand %p161, %p162
    %p164 = pneg %p163
    // Predicated region
    $region25: #{double_conv.6} parent=5 // pred_check
      _
    $region26: #{double_conv.6} parent=5 // pred_check_branch
      %166 = sbr.rel (%p163) target = $region28
    $region27: #{double_conv.6} parent=5 // pred_region
      %s167 = ssub.s32 %s10, 1
      %p168 = scmp.lt.s32.totalorder %s19, 1
      %s169 = scalar_select %p168, %s19, 1
      %p170 = scmp.lt.s32.totalorder %s20, 1
      %s171 = scalar_select %p170, %s20, 1
      %s172 = smul.addr %s171, 30
      %s173 = smul.addr %s169, 60
      %s174 = sadd.s32 %s172, %s173
      %s175 = smul.addr %s174, 8
      %s176 = scalar_lea.vmem %s0, %s175
      %p177 = pneg %p50
      %p178 = pneg %p47
      %p179 = pneg %p71
      %p180 = pneg %p68
      %p181 = pneg %p99
      %p182 = pneg %p96
      %p183 = scmp.lt.s32.totalorder %s19, 1
      %s184 = scalar_select %p183, %s19, 1
      %p185 = scmp.lt.s32.totalorder %s20, 1
      %s186 = scalar_select %p185, %s20, 1
      %s187 = smul.addr %s186, 16
      %s188 = smul.addr %s184, 32
      %s189 = sadd.s32 %s187, %s188
      %s190 = smul.addr %s189, 8
      %s191 = scalar_lea.vmem %s2, %s190
      %p192 = pneg %p127
      %p193 = pneg %p124
      %p194 = scmp.lt.s32.totalorder %s19, 1
      %s195 = scalar_select %p194, %s19, 1
      %p196 = scmp.lt.s32.totalorder %s20, 1
      %s197 = scalar_select %p196, %s20, 1
      %s198 = smul.addr %s195, 2
      %s199 = sadd.s32 %s197, %s198
      %s200 = smul.addr %s199, 2
      %s201 = scalar_lea.vmem %s3, %s200
      %p202 = scmp.lt.s32.totalorder %s19, 1
      %s203 = scalar_select %p202, %s19, 1
      %p204 = scmp.lt.s32.totalorder %s20, 1
      %s205 = scalar_select %p204, %s20, 1
      %s206 = smul.addr %s205, 30
      %s207 = smul.addr %s203, 60
      %s208 = sadd.s32 %s206, %s207
      %s209 = smul.addr %s208, 8
      %s210 = scalar_lea.vmem %s0, %s209
      %p211 = scmp.lt.s32.totalorder %s19, 1
      %s212 = scalar_select %p211, %s19, 1
      %p213 = scmp.lt.s32.totalorder %s20, 1
      %s214 = scalar_select %p213, %s20, 1
      %s215 = smul.addr %s214, 16
      %s216 = smul.addr %s212, 32
      %s217 = sadd.s32 %s215, %s216
      %s218 = smul.addr %s217, 8
      %s219 = scalar_lea.vmem %s2, %s218
      %p220 = scmp.lt.s32.totalorder %s19, 1
      %s221 = scalar_select %p220, %s19, 1
      %p222 = scmp.lt.s32.totalorder %s20, 1
      %s223 = scalar_select %p222, %s20, 1
      %s224 = smul.addr %s221, 2
      %s225 = sadd.s32 %s223, %s224
      %s226 = smul.addr %s225, 2
      %s227 = scalar_lea.vmem %s3, %s226
      %v229 = vld [vmem:[%s210] sm:$0xff]
      %v230 = vld [vmem:[%s210 + $0x8] sm:$0xff]
      %v231 = vld [vmem:[%s210 + $0x10] sm:$0x3]
      %v232 = vld [vmem:[%s210 + $0x18] sm:$0xff]
      %v233 = vld [vmem:[%s210 + $0x20] sm:$0xff]
      %v234 = vld [vmem:[%s210 + $0x28] sm:$0x3]
      %v235 = vld [vmem:[%s210 + $0x30] sm:$0xff]
      %v236 = vld [vmem:[%s210 + $0x38] sm:$0xff]
      %v237 = vld [vmem:[%s210 + $0x40] sm:$0x3]
      %v238 = vld [vmem:[%s210 + $0x48] sm:$0xff]
      %v239 = vld [vmem:[%s210 + $0x50] sm:$0xff]
      %v240 = vld [vmem:[%s210 + $0x58] sm:$0x3]
      %v241 = vld [vmem:[%s210 + $0x60] sm:$0xff]
      %v242 = vld [vmem:[%s210 + $0x68] sm:$0xff]
      %v243 = vld [vmem:[%s210 + $0x70] sm:$0x3]
      %v244 = vld [vmem:[%s210 + $0x78] sm:$0xff]
      %v245 = vld [vmem:[%s210 + $0x80] sm:$0xff]
      %v246 = vld [vmem:[%s210 + $0x88] sm:$0x3]
      %v247 = vld [vmem:[%s210 + $0x90] sm:$0xff]
      %v248 = vld [vmem:[%s210 + $0x98] sm:$0xff]
      %v249 = vld [vmem:[%s210 + $0xa0] sm:$0x3]
      %v250 = vld [vmem:[%s210 + $0xa8] sm:$0xff]
      %v251 = vld [vmem:[%s210 + $0xb0] sm:$0xff]
      %v252 = vld [vmem:[%s210 + $0xb8] sm:$0x3]
      %v253 = vld [vmem:[%s210 + $0xc0] sm:$0xff]
      %v254 = vld [vmem:[%s210 + $0xc8] sm:$0xff]
      %v255 = vld [vmem:[%s210 + $0xd0] sm:$0x3]
      %v256 = vld [vmem:[%s210 + $0xd8] sm:$0xff]
      %v257 = vld [vmem:[%s210 + $0xe0] sm:$0xff]
      %v258 = vld [vmem:[%s210 + $0xe8] sm:$0x3]
      %v259 = vpack.c.bf16 %v230, %v229
      %v260 = vpack.c.bf16 %v231, %v231
      %v261 = vpack.c.bf16 %v233, %v232
      %v262 = vpack.c.bf16 %v234, %v234
      %v263 = vpack.c.bf16 %v236, %v235
      %v264 = vpack.c.bf16 %v237, %v237
      %v265 = vpack.c.bf16 %v239, %v238
      %v266 = vpack.c.bf16 %v240, %v240
      %v267 = vpack.c.bf16 %v242, %v241
      %v268 = vpack.c.bf16 %v243, %v243
      %v269 = vpack.c.bf16 %v245, %v244
      %v270 = vpack.c.bf16 %v246, %v246
      %v271 = vpack.c.bf16 %v248, %v247
      %v272 = vpack.c.bf16 %v249, %v249
      %v273 = vpack.c.bf16 %v251, %v250
      %v274 = vpack.c.bf16 %v252, %v252
      %v275 = vpack.c.bf16 %v254, %v253
      %v276 = vpack.c.bf16 %v255, %v255
      %v277 = vpack.c.bf16 %v257, %v256
      %v278 = vpack.c.bf16 %v258, %v258
      %vm279 = vsmask.f32 7424
      %v281 = vshrl.u32 %v259, 16
      %v283 = vshll.u32 %v259, 16
      %v285 = vrot.slane %v283, 1
      %v286 = vor.u32 %v281, %v285
      %v288 = vshll.u32 %v260, 16
      %v290 = vrot.slane %v288, 1
      %v291 = vsel %vm279, %v286, %v290
      %v293 = vshrl.u32 %v261, 16
      %v295 = vshll.u32 %v261, 16
      %v297 = vrot.slane %v295, 1
      %v298 = vor.u32 %v293, %v297
      %v300 = vshll.u32 %v262, 16
      %v302 = vrot.slane %v300, 1
      %v303 = vsel %vm279, %v298, %v302
      %v305 = vshrl.u32 %v263, 16
      %v307 = vshll.u32 %v263, 16
      %v309 = vrot.slane %v307, 1
      %v310 = vor.u32 %v305, %v309
      %v312 = vshll.u32 %v264, 16
      %v314 = vrot.slane %v312, 1
      %v315 = vsel %vm279, %v310, %v314
      %v317 = vshrl.u32 %v265, 16
      %v319 = vshll.u32 %v265, 16
      %v321 = vrot.slane %v319, 1
      %v322 = vor.u32 %v317, %v321
      %v324 = vshll.u32 %v266, 16
      %v326 = vrot.slane %v324, 1
      %v327 = vsel %vm279, %v322, %v326
      %v329 = vshrl.u32 %v267, 16
      %v331 = vshll.u32 %v267, 16
      %v333 = vrot.slane %v331, 1
      %v334 = vor.u32 %v329, %v333
      %v336 = vshll.u32 %v268, 16
      %v338 = vrot.slane %v336, 1
      %v339 = vsel %vm279, %v334, %v338
      %v341 = vshrl.u32 %v269, 16
      %v343 = vshll.u32 %v269, 16
      %v345 = vrot.slane %v343, 1
      %v346 = vor.u32 %v341, %v345
      %v348 = vshll.u32 %v270, 16
      %v350 = vrot.slane %v348, 1
      %v351 = vsel %vm279, %v346, %v350
      %v353 = vshrl.u32 %v271, 16
      %v355 = vshll.u32 %v271, 16
      %v357 = vrot.slane %v355, 1
      %v358 = vor.u32 %v353, %v357
      %v360 = vshll.u32 %v272, 16
      %v362 = vrot.slane %v360, 1
      %v363 = vsel %vm279, %v358, %v362
      %v365 = vshrl.u32 %v273, 16
      %v367 = vshll.u32 %v273, 16
      %v369 = vrot.slane %v367, 1
      %v370 = vor.u32 %v365, %v369
      %v372 = vshll.u32 %v274, 16
      %v374 = vrot.slane %v372, 1
      %v375 = vsel %vm279, %v370, %v374
      %vm400 = vcmask 1046528
      %v401 = vrot.slane %v259, 1
      %v402 = vrot.slane %v260, 1
      %v403 = vsel %vm400, %v401, %v402
      %v404 = vrot.slane %v261, 1
      %v405 = vrot.slane %v262, 1
      %v406 = vsel %vm400, %v404, %v405
      %v407 = vrot.slane %v263, 1
      %v408 = vrot.slane %v264, 1
      %v409 = vsel %vm400, %v407, %v408
      %v410 = vrot.slane %v265, 1
      %v411 = vrot.slane %v266, 1
      %v412 = vsel %vm400, %v410, %v411
      %v413 = vrot.slane %v267, 1
      %v414 = vrot.slane %v268, 1
      %v415 = vsel %vm400, %v413, %v414
      %v416 = vrot.slane %v269, 1
      %v417 = vrot.slane %v270, 1
      %v418 = vsel %vm400, %v416, %v417
      %v419 = vrot.slane %v271, 1
      %v420 = vrot.slane %v272, 1
      %v421 = vsel %vm400, %v419, %v420
      %v422 = vrot.slane %v273, 1
      %v423 = vrot.slane %v274, 1
      %v424 = vsel %vm400, %v422, %v423
      %v434 = vshrl.u32 %v275, 16
      %v436 = vshll.u32 %v275, 16
      %v438 = vrot.slane %v436, 1
      %v439 = vor.u32 %v434, %v438
      %v441 = vshll.u32 %v276, 16
      %v443 = vrot.slane %v441, 1
      %v444 = vsel %vm279, %v439, %v443
      %v448 = vrot.slane %v275, 1
      %v449 = vrot.slane %v276, 1
      %v450 = vsel %vm400, %v448, %v449
      %v453 = vshrl.u32 %v277, 16
      %v455 = vshll.u32 %v277, 16
      %v457 = vrot.slane %v455, 1
      %v458 = vor.u32 %v453, %v457
      %v460 = vshll.u32 %v278, 16
      %v462 = vrot.slane %v460, 1
      %v463 = vsel %vm279, %v458, %v462
      %v467 = vrot.slane %v277, 1
      %v468 = vrot.slane %v278, 1
      %v469 = vsel %vm400, %v467, %v468
      %v471 = vld [vmem:[%s1] sm:$0xff]
      %v472 = vld [vmem:[%s1 + $0x8] sm:$0xff]
      %v473 = vld [vmem:[%s1 + $0x10] sm:$0xff]
      %v474 = vld [vmem:[%s1 + $0x18] sm:$0xff]
      %v475 = vld [vmem:[%s1 + $0x20] sm:$0xff]
      %v476 = vld [vmem:[%s1 + $0x28] sm:$0xff]
      %v477 = vld [vmem:[%s1 + $0x30] sm:$0xff]
      %v478 = vld [vmem:[%s1 + $0x38] sm:$0xff]
      %v479 = vld [vmem:[%s1 + $0x40] sm:$0xff]
      %v480 = vld [vmem:[%s1 + $0x48] sm:$0xff]
      %v481 = vld [vmem:[%s1 + $0x50] sm:$0xff]
      %v482 = vld [vmem:[%s1 + $0x58] sm:$0xff]
      %v483 = vld [vmem:[%s1 + $0x60] sm:$0xff]
      %v484 = vld [vmem:[%s1 + $0x68] sm:$0xff]
      %v485 = vld [vmem:[%s1 + $0x70] sm:$0xff]
      %v486 = vld [vmem:[%s1 + $0x78] sm:$0xff]
      %v487 = vld [vmem:[%s1 + $0x80] sm:$0xff]
      %v488 = vld [vmem:[%s1 + $0x88] sm:$0xff]
      %v489 = vld [vmem:[%s1 + $0x90] sm:$0xff]
      %v490 = vld [vmem:[%s1 + $0x98] sm:$0xff]
      %v491 = vld [vmem:[%s1 + $0xa0] sm:$0xff]
      %v492 = vld [vmem:[%s1 + $0xa8] sm:$0xff]
      %v493 = vld [vmem:[%s1 + $0xb0] sm:$0xff]
      %v494 = vld [vmem:[%s1 + $0xb8] sm:$0xff]
      %v495 = vld [vmem:[%s1 + $0xc0] sm:$0xff]
      %v496 = vld [vmem:[%s1 + $0xc8] sm:$0xff]
      %v497 = vld [vmem:[%s1 + $0xd0] sm:$0xff]
      %v498 = vld [vmem:[%s1 + $0xd8] sm:$0xff]
      %v499 = vld [vmem:[%s1 + $0xe0] sm:$0xff]
      %v500 = vld [vmem:[%s1 + $0xe8] sm:$0xff]
      %v501 = vld [vmem:[%s1 + $0xf0] sm:$0xff]
      %v502 = vld [vmem:[%s1 + $0xf8] sm:$0xff]
      %v503 = vld [vmem:[%s1 + $0x100] sm:$0xff]
      %v504 = vld [vmem:[%s1 + $0x108] sm:$0xff]
      %v505 = vld [vmem:[%s1 + $0x110] sm:$0xff]
      %v506 = vld [vmem:[%s1 + $0x118] sm:$0xff]
      %v507 = vld [vmem:[%s1 + $0x120] sm:$0xff]
      %v508 = vld [vmem:[%s1 + $0x128] sm:$0xff]
      %v509 = vld [vmem:[%s1 + $0x130] sm:$0xff]
      %v510 = vld [vmem:[%s1 + $0x138] sm:$0xff]
      %v511 = vld [vmem:[%s1 + $0x140] sm:$0xff]
      %v512 = vld [vmem:[%s1 + $0x148] sm:$0xff]
      %v513 = vld [vmem:[%s1 + $0x150] sm:$0xff]
      %v514 = vld [vmem:[%s1 + $0x158] sm:$0xff]
      %v515 = vld [vmem:[%s1 + $0x160] sm:$0xff]
      %v516 = vld [vmem:[%s1 + $0x168] sm:$0xff]
      %v517 = vld [vmem:[%s1 + $0x170] sm:$0xff]
      %v518 = vld [vmem:[%s1 + $0x178] sm:$0xff]
      %v519 = vld [vmem:[%s1 + $0x180] sm:$0xff]
      %v520 = vld [vmem:[%s1 + $0x188] sm:$0xff]
      %v521 = vld [vmem:[%s1 + $0x190] sm:$0xff]
      %v522 = vld [vmem:[%s1 + $0x198] sm:$0xff]
      %v523 = vld [vmem:[%s1 + $0x1a0] sm:$0xff]
      %v524 = vld [vmem:[%s1 + $0x1a8] sm:$0xff]
      %v525 = vld [vmem:[%s1 + $0x1b0] sm:$0xff]
      %v526 = vld [vmem:[%s1 + $0x1b8] sm:$0xff]
      %v527 = vld [vmem:[%s1 + $0x1c0] sm:$0xff]
      %v528 = vld [vmem:[%s1 + $0x1c8] sm:$0xff]
      %v529 = vld [vmem:[%s1 + $0x1d0] sm:$0xff]
      %v530 = vld [vmem:[%s1 + $0x1d8] sm:$0xff]
      %v531 = vld [vmem:[%s1 + $0x1e0] sm:$0xff]
      %v532 = vld [vmem:[%s1 + $0x1e8] sm:$0xff]
      %v533 = vld [vmem:[%s1 + $0x1f0] sm:$0xff]
      %v534 = vld [vmem:[%s1 + $0x1f8] sm:$0xff]
      %v535 = vld [vmem:[%s1 + $0x200] sm:$0xff]
      %v536 = vld [vmem:[%s1 + $0x208] sm:$0xff]
      %v537 = vld [vmem:[%s1 + $0x210] sm:$0xff]
      %v538 = vld [vmem:[%s1 + $0x218] sm:$0xff]
      %v539 = vld [vmem:[%s1 + $0x220] sm:$0xff]
      %v540 = vld [vmem:[%s1 + $0x228] sm:$0xff]
      %v541 = vld [vmem:[%s1 + $0x230] sm:$0xff]
      %v542 = vld [vmem:[%s1 + $0x238] sm:$0xff]
      %v543 = vld [vmem:[%s1 + $0x240] sm:$0xff]
      %v544 = vld [vmem:[%s1 + $0x248] sm:$0xff]
      %v545 = vld [vmem:[%s1 + $0x250] sm:$0xff]
      %v546 = vld [vmem:[%s1 + $0x258] sm:$0xff]
      %v547 = vld [vmem:[%s1 + $0x260] sm:$0xff]
      %v548 = vld [vmem:[%s1 + $0x268] sm:$0xff]
      %v549 = vld [vmem:[%s1 + $0x270] sm:$0xff]
      %v550 = vld [vmem:[%s1 + $0x278] sm:$0xff]
      %v551 = vld [vmem:[%s1 + $0x280] sm:$0xff]
      %v552 = vld [vmem:[%s1 + $0x288] sm:$0xff]
      %v553 = vld [vmem:[%s1 + $0x290] sm:$0xff]
      %v554 = vld [vmem:[%s1 + $0x298] sm:$0xff]
      %v555 = vld [vmem:[%s1 + $0x2a0] sm:$0xff]
      %v556 = vld [vmem:[%s1 + $0x2a8] sm:$0xff]
      %v557 = vld [vmem:[%s1 + $0x2b0] sm:$0xff]
      %v558 = vld [vmem:[%s1 + $0x2b8] sm:$0xff]
      %v559 = vld [vmem:[%s1 + $0x2c0] sm:$0xff]
      %v560 = vld [vmem:[%s1 + $0x2c8] sm:$0xff]
      %v561 = vld [vmem:[%s1 + $0x2d0] sm:$0xff]
      %v562 = vld [vmem:[%s1 + $0x2d8] sm:$0xff]
      %v563 = vld [vmem:[%s1 + $0x2e0] sm:$0xff]
      %v564 = vld [vmem:[%s1 + $0x2e8] sm:$0xff]
      %v565 = vld [vmem:[%s1 + $0x2f0] sm:$0xff]
      %v566 = vld [vmem:[%s1 + $0x2f8] sm:$0xff]
      %v567 = vld [vmem:[%s1 + $0x300] sm:$0xff]
      %v568 = vld [vmem:[%s1 + $0x308] sm:$0xff]
      %v569 = vld [vmem:[%s1 + $0x310] sm:$0xff]
      %v570 = vld [vmem:[%s1 + $0x318] sm:$0xff]
      %v571 = vld [vmem:[%s1 + $0x320] sm:$0xff]
      %v572 = vld [vmem:[%s1 + $0x328] sm:$0xff]
      %v573 = vld [vmem:[%s1 + $0x330] sm:$0xff]
      %v574 = vld [vmem:[%s1 + $0x338] sm:$0xff]
      %v575 = vld [vmem:[%s1 + $0x340] sm:$0xff]
      %v576 = vld [vmem:[%s1 + $0x348] sm:$0xff]
      %v577 = vld [vmem:[%s1 + $0x350] sm:$0xff]
      %v578 = vld [vmem:[%s1 + $0x358] sm:$0xff]
      %v579 = vld [vmem:[%s1 + $0x360] sm:$0xff]
      %v580 = vld [vmem:[%s1 + $0x368] sm:$0xff]
      %v581 = vld [vmem:[%s1 + $0x370] sm:$0xff]
      %v582 = vld [vmem:[%s1 + $0x378] sm:$0xff]
      %v583 = vld [vmem:[%s1 + $0x380] sm:$0xff]
      %v584 = vld [vmem:[%s1 + $0x388] sm:$0xff]
      %v585 = vld [vmem:[%s1 + $0x390] sm:$0xff]
      %v586 = vld [vmem:[%s1 + $0x398] sm:$0xff]
      %v587 = vld [vmem:[%s1 + $0x3a0] sm:$0xff]
      %v588 = vld [vmem:[%s1 + $0x3a8] sm:$0xff]
      %v589 = vld [vmem:[%s1 + $0x3b0] sm:$0xff]
      %v590 = vld [vmem:[%s1 + $0x3b8] sm:$0xff]
      %v591 = vld [vmem:[%s1 + $0x3c0] sm:$0xff]
      %v592 = vld [vmem:[%s1 + $0x3c8] sm:$0xff]
      %v593 = vld [vmem:[%s1 + $0x3d0] sm:$0xff]
      %v594 = vld [vmem:[%s1 + $0x3d8] sm:$0xff]
      %v595 = vld [vmem:[%s1 + $0x3e0] sm:$0xff]
      %v596 = vld [vmem:[%s1 + $0x3e8] sm:$0xff]
      %v597 = vld [vmem:[%s1 + $0x3f0] sm:$0xff]
      %v598 = vld [vmem:[%s1 + $0x3f8] sm:$0xff]
      %v599 = vld [vmem:[%s1 + $0x400] sm:$0xff]
      %v600 = vld [vmem:[%s1 + $0x408] sm:$0xff]
      %v601 = vld [vmem:[%s1 + $0x410] sm:$0xff]
      %v602 = vld [vmem:[%s1 + $0x418] sm:$0xff]
      %v603 = vld [vmem:[%s1 + $0x420] sm:$0xff]
      %v604 = vld [vmem:[%s1 + $0x428] sm:$0xff]
      %v605 = vld [vmem:[%s1 + $0x430] sm:$0xff]
      %v606 = vld [vmem:[%s1 + $0x438] sm:$0xff]
      %v607 = vld [vmem:[%s1 + $0x440] sm:$0xff]
      %v608 = vld [vmem:[%s1 + $0x448] sm:$0xff]
      %v609 = vld [vmem:[%s1 + $0x450] sm:$0xff]
      %v610 = vld [vmem:[%s1 + $0x458] sm:$0xff]
      %v611 = vld [vmem:[%s1 + $0x460] sm:$0xff]
      %v612 = vld [vmem:[%s1 + $0x468] sm:$0xff]
      %v613 = vld [vmem:[%s1 + $0x470] sm:$0xff]
      %v614 = vld [vmem:[%s1 + $0x478] sm:$0xff]
      %v615 = vpack.c.bf16 %v472, %v471
      %v616 = vpack.c.bf16 %v474, %v473
      %v617 = vpack.c.bf16 %v476, %v475
      %v618 = vpack.c.bf16 %v478, %v477
      %v619 = vpack.c.bf16 %v480, %v479
      %v620 = vpack.c.bf16 %v482, %v481
      %v621 = vpack.c.bf16 %v484, %v483
      %v622 = vpack.c.bf16 %v486, %v485
      %v623 = vpack.c.bf16 %v488, %v487
      %v624 = vpack.c.bf16 %v490, %v489
      %v625 = vpack.c.bf16 %v492, %v491
      %v626 = vpack.c.bf16 %v494, %v493
      %v627 = vpack.c.bf16 %v496, %v495
      %v628 = vpack.c.bf16 %v498, %v497
      %v629 = vpack.c.bf16 %v500, %v499
      %v630 = vpack.c.bf16 %v502, %v501
      %v631 = vpack.c.bf16 %v504, %v503
      %v632 = vpack.c.bf16 %v506, %v505
      %v633 = vpack.c.bf16 %v508, %v507
      %v634 = vpack.c.bf16 %v510, %v509
      %v635 = vpack.c.bf16 %v512, %v511
      %v636 = vpack.c.bf16 %v514, %v513
      %v637 = vpack.c.bf16 %v516, %v515
      %v638 = vpack.c.bf16 %v518, %v517
      %v639 = vpack.c.bf16 %v520, %v519
      %v640 = vpack.c.bf16 %v522, %v521
      %v641 = vpack.c.bf16 %v524, %v523
      %v642 = vpack.c.bf16 %v526, %v525
      %v643 = vpack.c.bf16 %v528, %v527
      %v644 = vpack.c.bf16 %v530, %v529
      %v645 = vpack.c.bf16 %v532, %v531
      %v646 = vpack.c.bf16 %v534, %v533
      %v647 = vpack.c.bf16 %v536, %v535
      %v648 = vpack.c.bf16 %v538, %v537
      %v649 = vpack.c.bf16 %v540, %v539
      %v650 = vpack.c.bf16 %v542, %v541
      %v651 = vpack.c.bf16 %v544, %v543
      %v652 = vpack.c.bf16 %v546, %v545
      %v653 = vpack.c.bf16 %v548, %v547
      %v654 = vpack.c.bf16 %v550, %v549
      %v655 = vpack.c.bf16 %v552, %v551
      %v656 = vpack.c.bf16 %v554, %v553
      %v657 = vpack.c.bf16 %v556, %v555
      %v658 = vpack.c.bf16 %v558, %v557
      %v659 = vpack.c.bf16 %v560, %v559
      %v660 = vpack.c.bf16 %v562, %v561
      %v661 = vpack.c.bf16 %v564, %v563
      %v662 = vpack.c.bf16 %v566, %v565
      %v663 = vpack.c.bf16 %v568, %v567
      %v664 = vpack.c.bf16 %v570, %v569
      %v665 = vpack.c.bf16 %v572, %v571
      %v666 = vpack.c.bf16 %v574, %v573
      %v667 = vpack.c.bf16 %v576, %v575
      %v668 = vpack.c.bf16 %v578, %v577
      %v669 = vpack.c.bf16 %v580, %v579
      %v670 = vpack.c.bf16 %v582, %v581
      %v671 = vpack.c.bf16 %v584, %v583
      %v672 = vpack.c.bf16 %v586, %v585
      %v673 = vpack.c.bf16 %v588, %v587
      %v674 = vpack.c.bf16 %v590, %v589
      %v675 = vpack.c.bf16 %v592, %v591
      %v676 = vpack.c.bf16 %v594, %v593
      %v677 = vpack.c.bf16 %v596, %v595
      %v678 = vpack.c.bf16 %v598, %v597
      %v679 = vpack.c.bf16 %v600, %v599
      %v680 = vpack.c.bf16 %v602, %v601
      %v681 = vpack.c.bf16 %v604, %v603
      %v682 = vpack.c.bf16 %v606, %v605
      %v683 = vpack.c.bf16 %v608, %v607
      %v684 = vpack.c.bf16 %v610, %v609
      %v685 = vpack.c.bf16 %v612, %v611
      %v686 = vpack.c.bf16 %v614, %v613
      %687 = vmatprep.subr.bf16.mxu0 0
      %688 = vmatpush1.bf16.msra.mxu0 %v615
      %689 = vmatprep.subr.bf16.mxu0 0
      %690 = vmatpush1.bf16.msra.mxu0 %v616
      %691 = vmatprep.subr.bf16.mxu0 0
      %692 = vmatpush1.bf16.msra.mxu0 %v617
      %693 = vmatprep.subr.bf16.mxu0 0
      %694 = vmatpush1.bf16.msra.mxu0 %v618
      %695 = vmatprep.subr.bf16.mxu0 0
      %696 = vmatpush1.bf16.msra.mxu0 %v619
      %697 = vmatprep.subr.bf16.mxu0 0
      %698 = vmatpush1.bf16.msra.mxu0 %v620
      %699 = vmatprep.subr.bf16.mxu0 0
      %700 = vmatpush1.bf16.msra.mxu0 %v621
      %701 = vmatprep.subr.bf16.mxu0 0
      %702 = vmatpush1.bf16.msra.mxu0 %v622
      %703 = vmatprep.subr.bf16.mxu0 0
      %704 = vmatpush1.bf16.msra.mxu0 %v623
      %705 = vmatprep.subr.bf16.mxu0 0
      %706 = vmatpush1.bf16.msra.mxu0 %v624
      %707 = vmatprep.subr.bf16.mxu0 0
      %708 = vmatpush1.bf16.msra.mxu0 %v625
      %709 = vmatprep.subr.bf16.mxu0 0
      %710 = vmatpush1.bf16.msra.mxu0 %v626
      %711 = vmatprep.subr.bf16.mxu0 0
      %712 = vmatpush1.bf16.msra.mxu0 %v627
      %713 = vmatprep.subr.bf16.mxu0 0
      %714 = vmatpush1.bf16.msra.mxu0 %v628
      %715 = vmatprep.subr.bf16.mxu0 0
      %716 = vmatpush1.bf16.msra.mxu0 %v629
      %717 = vmatprep.subr.bf16.mxu0 0
      %718 = vmatpush1.bf16.msra.mxu0 %v630
      %719 = vmatprep.mubr.bf16.mxu0 %v291
      %720 = vmatmul.mubr.bf16.gmra.mrb[0].mxu0 %v259
      %v721 = vpop.f32.mrb[0].mxu0
      %v722 = vadd.f32 0.0, %v721
      %v723 = vpop.f32.mrb[0].mxu0
      %v724 = vpop.f32.mrb[0].mxu0
      %v725 = vadd.f32 0.0, %v724
      %v726 = vpop.f32.mrb[0].mxu0
      %727 = vmatprep.mubr.bf16.mxu0 %v303
      %728 = vmatmul.mubr.bf16.gmra.mrb[0].mxu0 %v261
      %v729 = vpop.f32.mrb[0].mxu0
      %v730 = vadd.f32 0.0, %v729
      %v731 = vpop.f32.mrb[0].mxu0
      %v732 = vpop.f32.mrb[0].mxu0
      %v733 = vadd.f32 0.0, %v732
      %v734 = vpop.f32.mrb[0].mxu0
      %735 = vmatprep.mubr.bf16.mxu0 %v315
      %736 = vmatmul.mubr.bf16.gmra.mrb[0].mxu0 %v263
      %v737 = vpop.f32.mrb[0].mxu0
      %v738 = vadd.f32 0.0, %v737
      %v739 = vpop.f32.mrb[0].mxu0
      %v740 = vpop.f32.mrb[0].mxu0
      %v741 = vadd.f32 0.0, %v740
      %v742 = vpop.f32.mrb[0].mxu0
      %743 = vmatprep.mubr.bf16.mxu0 %v327
      %744 = vmatmul.mubr.bf16.gmra.mrb[0].mxu0 %v265
      %v745 = vpop.f32.mrb[0].mxu0
      %v746 = vadd.f32 0.0, %v745
      %v747 = vpop.f32.mrb[0].mxu0
      %v748 = vpop.f32.mrb[0].mxu0
      %v749 = vadd.f32 0.0, %v748
      %v750 = vpop.f32.mrb[0].mxu0
      %751 = vmatprep.mubr.bf16.mxu0 %v339
      %752 = vmatmul.mubr.bf16.gmra.mrb[0].mxu0 %v267
      %v753 = vpop.f32.mrb[0].mxu0
      %v754 = vadd.f32 0.0, %v753
      %v755 = vpop.f32.mrb[0].mxu0
      %v756 = vpop.f32.mrb[0].mxu0
      %v757 = vadd.f32 0.0, %v756
      %v758 = vpop.f32.mrb[0].mxu0
      %759 = vmatprep.mubr.bf16.mxu0 %v351
      %760 = vmatmul.mubr.bf16.gmra.mrb[0].mxu0 %v269
      %v761 = vpop.f32.mrb[0].mxu0
      %v762 = vadd.f32 0.0, %v761
      %v763 = vpop.f32.mrb[0].mxu0
      %v764 = vpop.f32.mrb[0].mxu0
      %v765 = vadd.f32 0.0, %v764
      %v766 = vpop.f32.mrb[0].mxu0
      %767 = vmatprep.mubr.bf16.mxu0 %v363
      %768 = vmatmul.mubr.bf16.gmra.mrb[0].mxu0 %v271
      %v769 = vpop.f32.mrb[0].mxu0
      %v770 = vadd.f32 0.0, %v769
      %v771 = vpop.f32.mrb[0].mxu0
      %v772 = vpop.f32.mrb[0].mxu0
      %v773 = vadd.f32 0.0, %v772
      %v774 = vpop.f32.mrb[0].mxu0
      %775 = vmatprep.mubr.bf16.mxu0 %v375
      %776 = vmatmul.mubr.bf16.gmra.mrb[0].mxu0 %v273
      %v777 = vpop.f32.mrb[0].mxu0
      %v778 = vadd.f32 0.0, %v777
      %v779 = vpop.f32.mrb[0].mxu0
      %v780 = vpop.f32.mrb[0].mxu0
      %v781 = vadd.f32 0.0, %v780
      %v782 = vpop.f32.mrb[0].mxu0
      %783 = vdwg.mxu0
      %784 = vmatprep.subr.bf16.mxu0 0
      %785 = vmatpush1.bf16.msra.mxu0 %v631
      %786 = vmatprep.subr.bf16.mxu0 0
      %787 = vmatpush1.bf16.msra.mxu0 %v632
      %788 = vmatprep.subr.bf16.mxu0 0
      %789 = vmatpush1.bf16.msra.mxu0 %v633
      %790 = vmatprep.subr.bf16.mxu0 0
      %791 = vmatpush1.bf16.msra.mxu0 %v634
      %792 = vmatprep.subr.bf16.mxu0 0
      %793 = vmatpush1.bf16.msra.mxu0 %v635
      %794 = vmatprep.subr.bf16.mxu0 0
      %795 = vmatpush1.bf16.msra.mxu0 %v636
      %796 = vmatprep.subr.bf16.mxu0 0
      %797 = vmatpush1.bf16.msra.mxu0 %v637
      %798 = vmatprep.subr.bf16.mxu0 0
      %799 = vmatpush1.bf16.msra.mxu0 %v638
      %800 = vmatprep.subr.bf16.mxu0 0
      %801 = vmatpush1.bf16.msra.mxu0 %v639
      %802 = vmatprep.subr.bf16.mxu0 0
      %803 = vmatpush1.bf16.msra.mxu0 %v640
      %804 = vmatprep.subr.bf16.mxu0 0
      %805 = vmatpush1.bf16.msra.mxu0 %v641
      %806 = vmatprep.subr.bf16.mxu0 0
      %807 = vmatpush1.bf16.msra.mxu0 %v642
      %808 = vmatprep.subr.bf16.mxu0 0
      %809 = vmatpush1.bf16.msra.mxu0 %v643
      %810 = vmatprep.subr.bf16.mxu0 0
      %811 = vmatpush1.bf16.msra.mxu0 %v644
      %812 = vmatprep.subr.bf16.mxu0 0
      %813 = vmatpush1.bf16.msra.mxu0 %v645
      %814 = vmatprep.subr.bf16.mxu0 0
      %815 = vmatpush1.bf16.msra.mxu0 %v646
      %816 = vmatprep.mubr.bf16.mxu0 %v261
      %817 = vmatmul.mubr.bf16.gmra.mrb[0].mxu0 %v403
      %v818 = vpop.f32.mrb[0].mxu0
      %v819 = vadd.f32 %v722, %v818
      %v820 = vpop.f32.mrb[0].mxu0
      %v821 = vpop.f32.mrb[0].mxu0
      %v822 = vadd.f32 %v725, %v821
      %v823 = vpop.f32.mrb[0].mxu0
      %824 = vmatprep.mubr.bf16.mxu0 %v263
      %825 = vmatmul.mubr.bf16.gmra.mrb[0].mxu0 %v406
      %v826 = vpop.f32.mrb[0].mxu0
      %v827 = vadd.f32 %v730, %v826
      %v828 = vpop.f32.mrb[0].mxu0
      %v829 = vpop.f32.mrb[0].mxu0
      %v830 = vadd.f32 %v733, %v829
      %v831 = vpop.f32.mrb[0].mxu0
      %832 = vmatprep.mubr.bf16.mxu0 %v265
      %833 = vmatmul.mubr.bf16.gmra.mrb[0].mxu0 %v409
      %v834 = vpop.f32.mrb[0].mxu0
      %v835 = vadd.f32 %v738, %v834
      %v836 = vpop.f32.mrb[0].mxu0
      %v837 = vpop.f32.mrb[0].mxu0
      %v838 = vadd.f32 %v741, %v837
      %v839 = vpop.f32.mrb[0].mxu0
      %840 = vmatprep.mubr.bf16.mxu0 %v267
      %841 = vmatmul.mubr.bf16.gmra.mrb[0].mxu0 %v412
      %v842 = vpop.f32.mrb[0].mxu0
      %v843 = vadd.f32 %v746, %v842
      %v844 = vpop.f32.mrb[0].mxu0
      %v845 = vpop.f32.mrb[0].mxu0
      %v846 = vadd.f32 %v749, %v845
      %v847 = vpop.f32.mrb[0].mxu0
      %848 = vmatprep.mubr.bf16.mxu0 %v269
      %849 = vmatmul.mubr.bf16.gmra.mrb[0].mxu0 %v415
      %v850 = vpop.f32.mrb[0].mxu0
      %v851 = vadd.f32 %v754, %v850
      %v852 = vpop.f32.mrb[0].mxu0
      %v853 = vpop.f32.mrb[0].mxu0
      %v854 = vadd.f32 %v757, %v853
      %v855 = vpop.f32.mrb[0].mxu0
      %856 = vmatprep.mubr.bf16.mxu0 %v271
      %857 = vmatmul.mubr.bf16.gmra.mrb[0].mxu0 %v418
      %v858 = vpop.f32.mrb[0].mxu0
      %v859 = vadd.f32 %v762, %v858
      %v860 = vpop.f32.mrb[0].mxu0
      %v861 = vpop.f32.mrb[0].mxu0
      %v862 = vadd.f32 %v765, %v861
      %v863 = vpop.f32.mrb[0].mxu0
      %864 = vmatprep.mubr.bf16.mxu0 %v273
      %865 = vmatmul.mubr.bf16.gmra.mrb[0].mxu0 %v421
      %v866 = vpop.f32.mrb[0].mxu0
      %v867 = vadd.f32 %v770, %v866
      %v868 = vpop.f32.mrb[0].mxu0
      %v869 = vpop.f32.mrb[0].mxu0
      %v870 = vadd.f32 %v773, %v869
      %v871 = vpop.f32.mrb[0].mxu0
      %872 = vmatprep.mubr.bf16.mxu0 %v275
      %873 = vmatmul.mubr.bf16.gmra.mrb[0].mxu0 %v424
      %v874 = vpop.f32.mrb[0].mxu0
      %v875 = vadd.f32 %v778, %v874
      %v876 = vpop.f32.mrb[0].mxu0
      %v877 = vpop.f32.mrb[0].mxu0
      %v878 = vadd.f32 %v781, %v877
      %v879 = vpop.f32.mrb[0].mxu0
      %880 = vdwg.mxu0
      %881 = vmatprep.subr.bf16.mxu0 0
      %882 = vmatpush1.bf16.msra.mxu0 %v647
      %883 = vmatprep.subr.bf16.mxu0 0
      %884 = vmatpush1.bf16.msra.mxu0 %v648
      %885 = vmatprep.subr.bf16.mxu0 0
      %886 = vmatpush1.bf16.msra.mxu0 %v649
      %887 = vmatprep.subr.bf16.mxu0 0
      %888 = vmatpush1.bf16.msra.mxu0 %v650
      %889 = vmatprep.subr.bf16.mxu0 0
      %890 = vmatpush1.bf16.msra.mxu0 %v651
      %891 = vmatprep.subr.bf16.mxu0 0
      %892 = vmatpush1.bf16.msra.mxu0 %v652
      %893 = vmatprep.subr.bf16.mxu0 0
      %894 = vmatpush1.bf16.msra.mxu0 %v653
      %895 = vmatprep.subr.bf16.mxu0 0
      %896 = vmatpush1.bf16.msra.mxu0 %v654
      %897 = vmatprep.subr.bf16.mxu0 0
      %898 = vmatpush1.bf16.msra.mxu0 %v655
      %899 = vmatprep.subr.bf16.mxu0 0
      %900 = vmatpush1.bf16.msra.mxu0 %v656
      %901 = vmatprep.subr.bf16.mxu0 0
      %902 = vmatpush1.bf16.msra.mxu0 %v657
      %903 = vmatprep.subr.bf16.mxu0 0
      %904 = vmatpush1.bf16.msra.mxu0 %v658
      %905 = vmatprep.subr.bf16.mxu0 0
      %906 = vmatpush1.bf16.msra.mxu0 %v659
      %907 = vmatprep.subr.bf16.mxu0 0
      %908 = vmatpush1.bf16.msra.mxu0 %v660
      %909 = vmatprep.subr.bf16.mxu0 0
      %910 = vmatpush1.bf16.msra.mxu0 %v661
      %911 = vmatprep.subr.bf16.mxu0 0
      %912 = vmatpush1.bf16.msra.mxu0 %v662
      %913 = vmatprep.mubr.bf16.mxu0 %v406
      %914 = vmatmul.mubr.bf16.gmra.mrb[0].mxu0 %v303
      %v915 = vpop.f32.mrb[0].mxu0
      %v916 = vadd.f32 %v819, %v915
      %v917 = vpop.f32.mrb[0].mxu0
      %v918 = vpop.f32.mrb[0].mxu0
      %v919 = vadd.f32 %v822, %v918
      %v920 = vpop.f32.mrb[0].mxu0
      %921 = vmatprep.mubr.bf16.mxu0 %v409
      %922 = vmatmul.mubr.bf16.gmra.mrb[0].mxu0 %v315
      %v923 = vpop.f32.mrb[0].mxu0
      %v924 = vadd.f32 %v827, %v923
      %v925 = vpop.f32.mrb[0].mxu0
      %v926 = vpop.f32.mrb[0].mxu0
      %v927 = vadd.f32 %v830, %v926
      %v928 = vpop.f32.mrb[0].mxu0
      %929 = vmatprep.mubr.bf16.mxu0 %v412
      %930 = vmatmul.mubr.bf16.gmra.mrb[0].mxu0 %v327
      %v931 = vpop.f32.mrb[0].mxu0
      %v932 = vadd.f32 %v835, %v931
      %v933 = vpop.f32.mrb[0].mxu0
      %v934 = vpop.f32.mrb[0].mxu0
      %v935 = vadd.f32 %v838, %v934
      %v936 = vpop.f32.mrb[0].mxu0
      %937 = vmatprep.mubr.bf16.mxu0 %v415
      %938 = vmatmul.mubr.bf16.gmra.mrb[0].mxu0 %v339
      %v939 = vpop.f32.mrb[0].mxu0
      %v940 = vadd.f32 %v843, %v939
      %v941 = vpop.f32.mrb[0].mxu0
      %v942 = vpop.f32.mrb[0].mxu0
      %v943 = vadd.f32 %v846, %v942
      %v944 = vpop.f32.mrb[0].mxu0
      %945 = vmatprep.mubr.bf16.mxu0 %v418
      %946 = vmatmul.mubr.bf16.gmra.mrb[0].mxu0 %v351
      %v947 = vpop.f32.mrb[0].mxu0
      %v948 = vadd.f32 %v851, %v947
      %v949 = vpop.f32.mrb[0].mxu0
      %v950 = vpop.f32.mrb[0].mxu0
      %v951 = vadd.f32 %v854, %v950
      %v952 = vpop.f32.mrb[0].mxu0
      %953 = vmatprep.mubr.bf16.mxu0 %v421
      %954 = vmatmul.mubr.bf16.gmra.mrb[0].mxu0 %v363
      %v955 = vpop.f32.mrb[0].mxu0
      %v956 = vadd.f32 %v859, %v955
      %v957 = vpop.f32.mrb[0].mxu0
      %v958 = vpop.f32.mrb[0].mxu0
      %v959 = vadd.f32 %v862, %v958
      %v960 = vpop.f32.mrb[0].mxu0
      %961 = vmatprep.mubr.bf16.mxu0 %v424
      %962 = vmatmul.mubr.bf16.gmra.mrb[0].mxu0 %v375
      %v963 = vpop.f32.mrb[0].mxu0
      %v964 = vadd.f32 %v867, %v963
      %v965 = vpop.f32.mrb[0].mxu0
      %v966 = vpop.f32.mrb[0].mxu0
      %v967 = vadd.f32 %v870, %v966
      %v968 = vpop.f32.mrb[0].mxu0
      %969 = vmatprep.mubr.bf16.mxu0 %v450
      %970 = vmatmul.mubr.bf16.gmra.mrb[0].mxu0 %v444
      %v971 = vpop.f32.mrb[0].mxu0
      %v972 = vadd.f32 %v875, %v971
      %v973 = vpop.f32.mrb[0].mxu0
      %v974 = vpop.f32.mrb[0].mxu0
      %v975 = vadd.f32 %v878, %v974
      %v976 = vpop.f32.mrb[0].mxu0
      %977 = vdwg.mxu0
      %978 = vmatprep.subr.bf16.mxu0 0
      %979 = vmatpush1.bf16.msra.mxu0 %v663
      %980 = vmatprep.subr.bf16.mxu0 0
      %981 = vmatpush1.bf16.msra.mxu0 %v664
      %982 = vmatprep.subr.bf16.mxu0 0
      %983 = vmatpush1.bf16.msra.mxu0 %v665
      %984 = vmatprep.subr.bf16.mxu0 0
      %985 = vmatpush1.bf16.msra.mxu0 %v666
      %986 = vmatprep.subr.bf16.mxu0 0
      %987 = vmatpush1.bf16.msra.mxu0 %v667
      %988 = vmatprep.subr.bf16.mxu0 0
      %989 = vmatpush1.bf16.msra.mxu0 %v668
      %990 = vmatprep.subr.bf16.mxu0 0
      %991 = vmatpush1.bf16.msra.mxu0 %v669
      %992 = vmatprep.subr.bf16.mxu0 0
      %993 = vmatpush1.bf16.msra.mxu0 %v670
      %994 = vmatprep.subr.bf16.mxu0 0
      %995 = vmatpush1.bf16.msra.mxu0 %v671
      %996 = vmatprep.subr.bf16.mxu0 0
      %997 = vmatpush1.bf16.msra.mxu0 %v672
      %998 = vmatprep.subr.bf16.mxu0 0
      %999 = vmatpush1.bf16.msra.mxu0 %v673
      %1000 = vmatprep.subr.bf16.mxu0 0
      %1001 = vmatpush1.bf16.msra.mxu0 %v674
      %1002 = vmatprep.subr.bf16.mxu0 0
      %1003 = vmatpush1.bf16.msra.mxu0 %v675
      %1004 = vmatprep.subr.bf16.mxu0 0
      %1005 = vmatpush1.bf16.msra.mxu0 %v676
      %1006 = vmatprep.subr.bf16.mxu0 0
      %1007 = vmatpush1.bf16.msra.mxu0 %v677
      %1008 = vmatprep.subr.bf16.mxu0 0
      %1009 = vmatpush1.bf16.msra.mxu0 %v678
      %1010 = vmatprep.mubr.bf16.mxu0 %v315
      %1011 = vmatmul.mubr.bf16.gmra.mrb[0].mxu0 %v263
      %v1012 = vpop.f32.mrb[0].mxu0
      %v1013 = vadd.f32 %v916, %v1012
      %v1014 = vpop.f32.mrb[0].mxu0
      %v1015 = vpop.f32.mrb[0].mxu0
      %v1016 = vadd.f32 %v919, %v1015
      %v1017 = vpop.f32.mrb[0].mxu0
      %1018 = vmatprep.mubr.bf16.mxu0 %v327
      %1019 = vmatmul.mubr.bf16.gmra.mrb[0].mxu0 %v265
      %v1020 = vpop.f32.mrb[0].mxu0
      %v1021 = vadd.f32 %v924, %v1020
      %v1022 = vpop.f32.mrb[0].mxu0
      %v1023 = vpop.f32.mrb[0].mxu0
      %v1024 = vadd.f32 %v927, %v1023
      %v1025 = vpop.f32.mrb[0].mxu0
      %1026 = vmatprep.mubr.bf16.mxu0 %v339
      %1027 = vmatmul.mubr.bf16.gmra.mrb[0].mxu0 %v267
      %v1028 = vpop.f32.mrb[0].mxu0
      %v1029 = vadd.f32 %v932, %v1028
      %v1030 = vpop.f32.mrb[0].mxu0
      %v1031 = vpop.f32.mrb[0].mxu0
      %v1032 = vadd.f32 %v935, %v1031
      %v1033 = vpop.f32.mrb[0].mxu0
      %1034 = vmatprep.mubr.bf16.mxu0 %v351
      %1035 = vmatmul.mubr.bf16.gmra.mrb[0].mxu0 %v269
      %v1036 = vpop.f32.mrb[0].mxu0
      %v1037 = vadd.f32 %v940, %v1036
      %v1038 = vpop.f32.mrb[0].mxu0
      %v1039 = vpop.f32.mrb[0].mxu0
      %v1040 = vadd.f32 %v943, %v1039
      %v1041 = vpop.f32.mrb[0].mxu0
      %1042 = vmatprep.mubr.bf16.mxu0 %v363
      %1043 = vmatmul.mubr.bf16.gmra.mrb[0].mxu0 %v271
      %v1044 = vpop.f32.mrb[0].mxu0
      %v1045 = vadd.f32 %v948, %v1044
      %v1046 = vpop.f32.mrb[0].mxu0
      %v1047 = vpop.f32.mrb[0].mxu0
      %v1048 = vadd.f32 %v951, %v1047
      %v1049 = vpop.f32.mrb[0].mxu0
      %1050 = vmatprep.mubr.bf16.mxu0 %v375
      %1051 = vmatmul.mubr.bf16.gmra.mrb[0].mxu0 %v273
      %v1052 = vpop.f32.mrb[0].mxu0
      %v1053 = vadd.f32 %v956, %v1052
      %v1054 = vpop.f32.mrb[0].mxu0
      %v1055 = vpop.f32.mrb[0].mxu0
      %v1056 = vadd.f32 %v959, %v1055
      %v1057 = vpop.f32.mrb[0].mxu0
      %1058 = vmatprep.mubr.bf16.mxu0 %v444
      %1059 = vmatmul.mubr.bf16.gmra.mrb[0].mxu0 %v275
      %v1060 = vpop.f32.mrb[0].mxu0
      %v1061 = vadd.f32 %v964, %v1060
      %v1062 = vpop.f32.mrb[0].mxu0
      %v1063 = vpop.f32.mrb[0].mxu0
      %v1064 = vadd.f32 %v967, %v1063
      %v1065 = vpop.f32.mrb[0].mxu0
      %1066 = vmatprep.mubr.bf16.mxu0 %v463
      %1067 = vmatmul.mubr.bf16.gmra.mrb[0].mxu0 %v277
      %v1068 = vpop.f32.mrb[0].mxu0
      %v1069 = vadd.f32 %v972, %v1068
      %v1070 = vpop.f32.mrb[0].mxu0
      %v1071 = vpop.f32.mrb[0].mxu0
      %v1072 = vadd.f32 %v975, %v1071
      %v1073 = vpop.f32.mrb[0].mxu0
      %1074 = vdwg.mxu0
      %1075 = vmatprep.subr.bf16.mxu0 0
      %1076 = vmatpush1.bf16.msra.mxu0 %v679
      %1077 = vmatprep.subr.bf16.mxu0 0
      %1078 = vmatpush1.bf16.msra.mxu0 %v680
      %1079 = vmatprep.subr.bf16.mxu0 0
      %1080 = vmatpush1.bf16.msra.mxu0 %v681
      %1081 = vmatprep.subr.bf16.mxu0 0
      %1082 = vmatpush1.bf16.msra.mxu0 %v682
      %1083 = vmatprep.subr.bf16.mxu0 0
      %1084 = vmatpush1.bf16.msra.mxu0 %v683
      %1085 = vmatprep.subr.bf16.mxu0 0
      %1086 = vmatpush1.bf16.msra.mxu0 %v684
      %1087 = vmatprep.subr.bf16.mxu0 0
      %1088 = vmatpush1.bf16.msra.mxu0 %v685
      %1089 = vmatprep.subr.bf16.mxu0 0
      %1090 = vmatpush1.bf16.msra.mxu0 %v686
      %1091 = vmatprep.subr.bf16.mxu0 0
      %1092 = vmatpush1.bf16.msra.mxu0 0
      %1093 = vmatprep.subr.bf16.mxu0 0
      %1094 = vmatpush1.bf16.msra.mxu0 0
      %1095 = vmatprep.subr.bf16.mxu0 0
      %1096 = vmatpush1.bf16.msra.mxu0 0
      %1097 = vmatprep.subr.bf16.mxu0 0
      %1098 = vmatpush1.bf16.msra.mxu0 0
      %1099 = vmatprep.subr.bf16.mxu0 0
      %1100 = vmatpush1.bf16.msra.mxu0 0
      %1101 = vmatprep.subr.bf16.mxu0 0
      %1102 = vmatpush1.bf16.msra.mxu0 0
      %1103 = vmatprep.subr.bf16.mxu0 0
      %1104 = vmatpush1.bf16.msra.mxu0 0
      %1105 = vmatprep.subr.bf16.mxu0 0
      %1106 = vmatpush1.bf16.msra.mxu0 0
      %1107 = vmatprep.mubr.bf16.mxu0 0
      %1108 = vmatmul.mubr.bf16.gmra.mrb[0].mxu0 %v409
      %v1109 = vpop.f32.mrb[0].mxu0
      %v1110 = vadd.f32 %v1013, %v1109
      %v1111 = vpop.f32.mrb[0].mxu0
      %v1112 = vpop.f32.mrb[0].mxu0
      %v1113 = vadd.f32 %v1016, %v1112
      %v1114 = vpop.f32.mrb[0].mxu0
      %1115 = vmatprep.mubr.bf16.mxu0 0
      %1116 = vmatmul.mubr.bf16.gmra.mrb[0].mxu0 %v412
      %v1117 = vpop.f32.mrb[0].mxu0
      %v1118 = vadd.f32 %v1021, %v1117
      %v1119 = vpop.f32.mrb[0].mxu0
      %v1120 = vpop.f32.mrb[0].mxu0
      %v1121 = vadd.f32 %v1024, %v1120
      %v1122 = vpop.f32.mrb[0].mxu0
      %1123 = vmatprep.mubr.bf16.mxu0 0
      %1124 = vmatmul.mubr.bf16.gmra.mrb[0].mxu0 %v415
      %v1125 = vpop.f32.mrb[0].mxu0
      %v1126 = vadd.f32 %v1029, %v1125
      %v1127 = vpop.f32.mrb[0].mxu0
      %v1128 = vpop.f32.mrb[0].mxu0
      %v1129 = vadd.f32 %v1032, %v1128
      %v1130 = vpop.f32.mrb[0].mxu0
      %1131 = vmatprep.mubr.bf16.mxu0 0
      %1132 = vmatmul.mubr.bf16.gmra.mrb[0].mxu0 %v418
      %v1133 = vpop.f32.mrb[0].mxu0
      %v1134 = vadd.f32 %v1037, %v1133
      %v1135 = vpop.f32.mrb[0].mxu0
      %v1136 = vpop.f32.mrb[0].mxu0
      %v1137 = vadd.f32 %v1040, %v1136
      %v1138 = vpop.f32.mrb[0].mxu0
      %1139 = vmatprep.mubr.bf16.mxu0 0
      %1140 = vmatmul.mubr.bf16.gmra.mrb[0].mxu0 %v421
      %v1141 = vpop.f32.mrb[0].mxu0
      %v1142 = vadd.f32 %v1045, %v1141
      %v1143 = vpop.f32.mrb[0].mxu0
      %v1144 = vpop.f32.mrb[0].mxu0
      %v1145 = vadd.f32 %v1048, %v1144
      %v1146 = vpop.f32.mrb[0].mxu0
      %1147 = vmatprep.mubr.bf16.mxu0 0
      %1148 = vmatmul.mubr.bf16.gmra.mrb[0].mxu0 %v424
      %v1149 = vpop.f32.mrb[0].mxu0
      %v1150 = vadd.f32 %v1053, %v1149
      %v1151 = vpop.f32.mrb[0].mxu0
      %v1152 = vpop.f32.mrb[0].mxu0
      %v1153 = vadd.f32 %v1056, %v1152
      %v1154 = vpop.f32.mrb[0].mxu0
      %1155 = vmatprep.mubr.bf16.mxu0 0
      %1156 = vmatmul.mubr.bf16.gmra.mrb[0].mxu0 %v450
      %v1157 = vpop.f32.mrb[0].mxu0
      %v1158 = vadd.f32 %v1061, %v1157
      %v1159 = vpop.f32.mrb[0].mxu0
      %v1160 = vpop.f32.mrb[0].mxu0
      %v1161 = vadd.f32 %v1064, %v1160
      %v1162 = vpop.f32.mrb[0].mxu0
      %1163 = vmatprep.mubr.bf16.mxu0 0
      %1164 = vmatmul.mubr.bf16.gmra.mrb[0].mxu0 %v469
      %v1165 = vpop.f32.mrb[0].mxu0
      %v1166 = vadd.f32 %v1069, %v1165
      %v1167 = vpop.f32.mrb[0].mxu0
      %v1168 = vpop.f32.mrb[0].mxu0
      %v1169 = vadd.f32 %v1072, %v1168
      %v1170 = vpop.f32.mrb[0].mxu0
      %1171 = vdwg.mxu0
      %1172 = vst [vmem:[%s219] sm:$0xff] %v1110
      %1173 = vst [vmem:[%s219 + $0x8] sm:$0xff] %v1113
      %1174 = vst [vmem:[%s219 + $0x10] sm:$0xff] %v1118
      %1175 = vst [vmem:[%s219 + $0x18] sm:$0xff] %v1121
      %1176 = vst [vmem:[%s219 + $0x20] sm:$0xff] %v1126
      %1177 = vst [vmem:[%s219 + $0x28] sm:$0xff] %v1129
      %1178 = vst [vmem:[%s219 + $0x30] sm:$0xff] %v1134
      %1179 = vst [vmem:[%s219 + $0x38] sm:$0xff] %v1137
      %1180 = vst [vmem:[%s219 + $0x40] sm:$0xff] %v1142
      %1181 = vst [vmem:[%s219 + $0x48] sm:$0xff] %v1145
      %1182 = vst [vmem:[%s219 + $0x50] sm:$0xff] %v1150
      %1183 = vst [vmem:[%s219 + $0x58] sm:$0xff] %v1153
      %1184 = vst [vmem:[%s219 + $0x60] sm:$0xff] %v1158
      %1185 = vst [vmem:[%s219 + $0x68] sm:$0xff] %v1161
      %1186 = vst [vmem:[%s219 + $0x70] sm:$0xff] %v1166
      %1187 = vst [vmem:[%s219 + $0x78] sm:$0xff] %v1169
      %v1188 = vadd.f32 %v1110, %v1113
      %v1189 = vadd.f32 %v1188, %v1118
      %v1190 = vadd.f32 %v1189, %v1121
      %v1191 = vadd.f32 %v1190, %v1126
      %v1192 = vadd.f32 %v1191, %v1129
      %v1193 = vadd.f32 %v1192, %v1134
      %v1194 = vadd.f32 %v1193, %v1137
      %v1195 = vadd.f32 %v1194, %v1142
      %v1196 = vadd.f32 %v1195, %v1145
      %v1197 = vadd.f32 %v1196, %v1150
      %v1198 = vadd.f32 %v1197, %v1153
      %v1199 = vadd.f32 %v1198, %v1158
      %v1200 = vadd.f32 %v1199, %v1161
      %v1201 = vadd.f32 %v1200, %v1166
      %v1202 = vadd.f32 %v1201, %v1169
      %v1203 = vrot.slane %v1202, 4
      %v1204 = vadd.f32 %v1202, %v1203
      %v1205 = vrot.slane %v1204, 2
      %v1206 = vadd.f32 %v1204, %v1205
      %v1207 = vrot.slane %v1206, 1
      %v1208 = vadd.f32 %v1206, %v1207
      %v1209 = vmul.f32 %v1110, %v1110
      %v1210 = vmul.f32 %v1113, %v1113
      %v1211 = vmul.f32 %v1118, %v1118
      %v1212 = vmul.f32 %v1121, %v1121
      %v1213 = vmul.f32 %v1126, %v1126
      %v1214 = vmul.f32 %v1129, %v1129
      %v1215 = vmul.f32 %v1134, %v1134
      %v1216 = vmul.f32 %v1137, %v1137
      %v1217 = vmul.f32 %v1142, %v1142
      %v1218 = vmul.f32 %v1145, %v1145
      %v1219 = vmul.f32 %v1150, %v1150
      %v1220 = vmul.f32 %v1153, %v1153
      %v1221 = vmul.f32 %v1158, %v1158
      %v1222 = vmul.f32 %v1161, %v1161
      %v1223 = vmul.f32 %v1166, %v1166
      %v1224 = vmul.f32 %v1169, %v1169
      %v1225 = vadd.f32 %v1209, %v1210
      %v1226 = vadd.f32 %v1225, %v1211
      %v1227 = vadd.f32 %v1226, %v1212
      %v1228 = vadd.f32 %v1227, %v1213
      %v1229 = vadd.f32 %v1228, %v1214
      %v1230 = vadd.f32 %v1229, %v1215
      %v1231 = vadd.f32 %v1230, %v1216
      %v1232 = vadd.f32 %v1231, %v1217
      %v1233 = vadd.f32 %v1232, %v1218
      %v1234 = vadd.f32 %v1233, %v1219
      %v1235 = vadd.f32 %v1234, %v1220
      %v1236 = vadd.f32 %v1235, %v1221
      %v1237 = vadd.f32 %v1236, %v1222
      %v1238 = vadd.f32 %v1237, %v1223
      %v1239 = vadd.f32 %v1238, %v1224
      %v1240 = vrot.slane %v1239, 4
      %v1241 = vadd.f32 %v1239, %v1240
      %v1242 = vrot.slane %v1241, 2
      %v1243 = vadd.f32 %v1241, %v1242
      %v1244 = vrot.slane %v1243, 1
      %v1245 = vadd.f32 %v1243, %v1244
      %vm1246 = vcmask 1040384
      %v1247 = vsel %vm1246, %v1208, %v1245
      %1248 = vst [vmem:[%s227] sm:$0x3] %v1247
      %p1249 = scmp.lt.s32.totalorder %s19, 1
      %s1250 = scalar_select %p1249, %s19, 1
      %p1251 = scmp.lt.s32.totalorder %s20, 1
      %s1252 = scalar_select %p1251, %s20, 1
      %s1253 = smul.addr %s1252, 16
      %s1254 = smul.addr %s1250, 32
      %s1255 = sadd.s32 %s1253, %s1254
      %s1256 = smul.addr %s1255, 8
      %s1257 = scalar_lea.vmem %s2, %s1256
      %p1258 = scmp.lt.s32.totalorder %s19, 1
      %s1259 = scalar_select %p1258, %s19, 1
      %p1260 = scmp.lt.s32.totalorder %s20, 1
      %s1261 = scalar_select %p1260, %s20, 1
      %s1262 = smul.addr %s1259, 2
      %s1263 = sadd.s32 %s1261, %s1262
      %s1264 = smul.addr %s1263, 2
      %s1265 = scalar_lea.vmem %s3, %s1264
      // Predicated region
      $region29: #{double_conv.6} parent=27 // pred_check
        %p1266 = pneg %p96
      $region30: #{double_conv.6} parent=27 // pred_check_branch
        %1268 = sbr.rel (%p1266) target = $region32
      $region31: #{double_conv.6} parent=27 // pred_region
        _
      $region32: #{double_conv.6} parent=27 // pred_fallthru
        _
      // Predicated region
      $region33: #{double_conv.6} parent=27 // pred_check
        %p1269 = pneg %p124
      $region34: #{double_conv.6} parent=27 // pred_check_branch
        %1271 = sbr.rel (%p1269) target = $region36
      $region35: #{double_conv.6} parent=27 // pred_region
        _
      $region36: #{double_conv.6} parent=27 // pred_fallthru
        _
    $region28: #{double_conv.6} parent=5 // pred_fallthru
      _
    %p1272 = scmp.le.s32.totalorder 2, %s10
    // Predicated region
    $region37: #{double_conv.6} parent=5 // pred_check
      %p1273 = pneg %p1272
    $region38: #{double_conv.6} parent=5 // pred_check_branch
      %1275 = sbr.rel (%p1273) target = $region40
    $region39: #{double_conv.6} parent=5 // pred_region
      %s1276 = ssub.s32 %s10, 2
      // Predicated region
      $region41: #{double_conv.6} parent=39 // pred_check
        %p1277 = pneg %p102
      $region42: #{double_conv.6} parent=39 // pred_check_branch
        %1279 = sbr.rel (%p1277) target = $region44
      $region43: #{double_conv.6} parent=39 // pred_region
        %p1280 = scmp.lt.s32.totalorder %s21, 1
        %s1281 = scalar_select %p1280, %s21, 1
        %p1282 = scmp.lt.s32.totalorder %s22, 1
        %s1283 = scalar_select %p1282, %s22, 1
        %s1284 = smul.addr %s1283, 16
        %s1285 = smul.addr %s1281, 32
        %s1286 = sadd.s32 %s1284, %s1285
        %s1287 = smul.addr %s1286, 8
        %s1288 = scalar_lea.vmem %s2, %s1287
      $region44: #{double_conv.6} parent=39 // pred_fallthru
        _
      // Predicated region
      $region45: #{double_conv.6} parent=39 // pred_check
        %p1289 = pneg %p130
      $region46: #{double_conv.6} parent=39 // pred_check_branch
        %1291 = sbr.rel (%p1289) target = $region48
      $region47: #{double_conv.6} parent=39 // pred_region
        %p1292 = scmp.lt.s32.totalorder %s21, 1
        %s1293 = scalar_select %p1292, %s21, 1
        %p1294 = scmp.lt.s32.totalorder %s22, 1
        %s1295 = scalar_select %p1294, %s22, 1
        %s1296 = smul.addr %s1293, 2
        %s1297 = sadd.s32 %s1295, %s1296
        %s1298 = smul.addr %s1297, 2
        %s1299 = scalar_lea.vmem %s3, %s1298
      $region48: #{double_conv.6} parent=39 // pred_fallthru
        _
    $region40: #{double_conv.6} parent=5 // pred_fallthru
      _
  $region6: #{double_conv.6} parent=0 // loop_footer
    %s14 = sadd.s32 1, %s10
  $region7: #{double_conv.6} parent=0 // loop_footer_branch
    %9 = sbr.rel target = $region3
  $region8: #{double_conv.6} parent=0 // loop_exit
    _

</llo_original>
